<compile_context>
chip_gen: v5e
topology: v5e:2x2
jax: 0.10.0
libtpu: 0.0.40
codegen_flags: <defaults>
</compile_context>

<pallas_src>
import functools

import jax
import jax.numpy as jnp
import numpy as np
from jax import lax
from jax.experimental import pallas as pl
from jax.experimental.pallas import tpu as pltpu


def _round_up(x, m):
    return (x + m - 1) // m * m


# ----------------------------- Pallas kernel ------------------------------


def _vq_kernel(z_ref, win_ref, bin_ref, cbn_ref, c2_ref, cbt_ref, wout_ref,
               bout_ref, zq_ref, ze_ref, idx_ref, err_ref, *,
               n_codes_pad, mxu_dtype):
    # Channel-major / time-minor tiles: z block is (1, Din_p, tT).
    z = z_ref[0]                                                       # (Din_p, tT)

    # in_proj (weight-normalized 1x1 conv): W_in @ z + b_in.
    z_e = jnp.dot(win_ref[...].astype(mxu_dtype), z.astype(mxu_dtype),
                  preferred_element_type=jnp.float32) + bin_ref[...]   # (Dc_p, tT)
    ze_ref[0] = z_e

    # F.normalize over the code dimension (per timestep column).
    nrm = jnp.sqrt(jnp.sum(z_e * z_e, axis=0, keepdims=True))          # (1, tT)
    e_n = z_e / jnp.maximum(nrm, 1e-12)

    # Distance to the normalized codebook.  |e_n|^2 is constant per timestep
    # (L2-normalized) so it cannot change the argmin and is dropped.
    # Padded codes carry +1e30 inside c2 so they are never selected.
    sim = jnp.dot(cbn_ref[...].astype(mxu_dtype), e_n.astype(mxu_dtype),
                  preferred_element_type=jnp.float32)                  # (Ncb_p, tT)
    dist = c2_ref[...] - 2.0 * sim

    # argmin over the code axis (sublanes), first-occurrence tie-break.
    # Indices are tracked as exact f32 integers (safe for Ncb < 2^24) so all
    # reductions stay on the well-supported f32 path; result is lane-dense.
    dmin = jnp.min(dist, axis=0, keepdims=True)                        # (1, tT)
    iota = lax.broadcasted_iota(jnp.int32, dist.shape, 0).astype(jnp.float32)
    idx_f = jnp.min(jnp.where(dist == dmin, iota, float(n_codes_pad)),
                    axis=0, keepdims=True)                             # (1, tT)
    idx_ref[0] = idx_f.astype(jnp.int32)

    # Codebook gather as an exact one-hot matmul (stays on the MXU).
    one_hot = (iota == idx_f).astype(mxu_dtype)                        # (Ncb_p, tT)
    z_q = jnp.dot(cbt_ref[...].astype(mxu_dtype), one_hot,
                  preferred_element_type=jnp.float32)                  # (Dc_p, tT)

    # Per-timestep squared error for commitment / codebook losses (lane-dense).
    diff = z_e - z_q
    err_ref[0] = jnp.sum(diff * diff, axis=0, keepdims=True)           # (1, tT)

    # Straight-through forward value == z_q, then out_proj.
    zq_ref[0] = jnp.dot(wout_ref[...].astype(mxu_dtype), z_q.astype(mxu_dtype),
                        preferred_element_type=jnp.float32) + bout_ref[...]


# ------------------------------- JAX glue ---------------------------------


def _weight_norm(v, g):
    """PyTorch weight_norm(dim=0) for a 1x1 Conv1d: per-output-channel rescale."""
    nrm = jnp.sqrt(jnp.sum(v * v, axis=1, keepdims=True))
    return v * (g[:, None] / nrm)


def _vmem_estimate(tT, Din_p, Dc_p, Ncb_p):
    """Rough per-step VMEM working set (bytes) for the tile-size budget."""
    col = 4 * tT
    acts = col * (2 * Din_p          # z input (double-buffered)
                  + 2 * Din_p        # out_proj(z_q) output (double-buffered)
                  + 2 * Dc_p         # z_e output (double-buffered)
                  + 3 * Ncb_p        # dist + iota + one_hot
                  + 3 * Dc_p)        # z_e, e_n, z_q live values
    weights = 4 * (2 * Dc_p * Din_p + 2 * Ncb_p * Dc_p + Dc_p + Ncb_p + Din_p)
    return acts + weights


def vector_quantize_forward(z, params, *, tT=512, mxu_dtype=jnp.float32):
    """z: (B, input_dim, T). Returns (z_q, commitment_loss, codebook_loss, indices, z_e)."""
    f32 = jnp.float32
    w_in = _weight_norm(params["in_v"], params["in_g"]).astype(f32)      # (Dc, Din)
    w_out = _weight_norm(params["out_v"], params["out_g"]).astype(f32)   # (Din, Dc)
    b_in = params["in_b"].astype(f32)
    b_out = params["out_b"].astype(f32)
    codebook = params["codebook"].astype(f32)                            # (Ncb, Dc)

    B, Din, T = z.shape
    Ncb, Dc = codebook.shape

    Din_p = _round_up(Din, 128)
    Dc_p = _round_up(Dc, 128)
    Ncb_p = _round_up(Ncb, 128)

    # --- time-tile selection -------------------------------------------------
    tT = max(128, _round_up(min(tT, _round_up(T, 128)), 128))
    # v7x has 2 TensorCores: make sure the parallel grid has >= 2 steps if possible.
    if B * ((T + tT - 1) // tT) < 2 and tT > 128:
        tT = max(128, _round_up((T + 1) // 2, 128))
    # Shrink the tile until the working set fits a v7x-safe VMEM budget (64 MiB phys).
    while tT > 128 and _vmem_estimate(tT, Din_p, Dc_p, Ncb_p) > 40 * 1024 * 1024:
        tT = max(128, _round_up(tT // 2, 128))
    T_p = _round_up(T, tT)

    # --- operand packing (channel-major layout; no activation transposes) ----
    z_p = z.astype(f32)
    if Din_p != Din or T_p != T:
        z_p = jnp.pad(z_p, ((0, 0), (0, Din_p - Din), (0, T_p - T)))

    win_p = jnp.zeros((Dc_p, Din_p), f32).at[:Dc, :Din].set(w_in)
    bin_p = jnp.zeros((Dc_p, 1), f32).at[:Dc, 0].set(b_in)

    cb_n = codebook / jnp.maximum(
        jnp.sqrt(jnp.sum(codebook * codebook, axis=1, keepdims=True)), 1e-12)
    cbn_p = jnp.zeros((Ncb_p, Dc_p), f32).at[:Ncb, :Dc].set(cb_n)
    c2_p = jnp.full((Ncb_p, 1), 1e30, f32).at[:Ncb, 0].set(jnp.sum(cb_n * cb_n, axis=1))
    cbt_p = jnp.zeros((Dc_p, Ncb_p), f32).at[:Dc, :Ncb].set(codebook.T)

    wout_p = jnp.zeros((Din_p, Dc_p), f32).at[:Din, :Dc].set(w_out)
    bout_p = jnp.zeros((Din_p, 1), f32).at[:Din, 0].set(b_out)

    grid = (B, T_p // tT)
    const = lambda b, t: (0, 0)                       # grid-invariant operands
    resident = dict(pipeline_mode=pl.Buffered(1))     # single-buffer: they never change

    flops = 2 * B * T_p * (2 * Dc_p * Din_p + 2 * Dc_p * Ncb_p)
    bytes_accessed = 4 * (2 * B * Din_p * T_p + B * Dc_p * T_p + 2 * B * T_p
                          + 2 * Dc_p * Din_p + 2 * Ncb_p * Dc_p
                          + Dc_p + Ncb_p + Din_p)

    kern = functools.partial(_vq_kernel, n_codes_pad=Ncb_p, mxu_dtype=mxu_dtype)
    zq_p, ze_p, idx_p, err_p = pl.pallas_call(
        kern,
        out_shape=(
            jax.ShapeDtypeStruct((B, Din_p, T_p), f32),    # out_proj(z_q)
            jax.ShapeDtypeStruct((B, Dc_p, T_p), f32),     # z_e
            jax.ShapeDtypeStruct((B, 1, T_p), jnp.int32),  # indices (lane-dense)
            jax.ShapeDtypeStruct((B, 1, T_p), f32),        # per-timestep sq-error
        ),
        grid=grid,
        in_specs=[
            pl.BlockSpec((1, Din_p, tT), lambda b, t: (b, 0, t)),   # z (tiled over B, T)
            pl.BlockSpec((Dc_p, Din_p), const, **resident),         # W_in
            pl.BlockSpec((Dc_p, 1), const, **resident),             # b_in
            pl.BlockSpec((Ncb_p, Dc_p), const, **resident),         # normalized codebook
            pl.BlockSpec((Ncb_p, 1), const, **resident),            # |cb_n|^2 (+1e30 pad)
            pl.BlockSpec((Dc_p, Ncb_p), const, **resident),         # raw codebook^T
            pl.BlockSpec((Din_p, Dc_p), const, **resident),         # W_out
            pl.BlockSpec((Din_p, 1), const, **resident),            # b_out
        ],
        out_specs=(
            pl.BlockSpec((1, Din_p, tT), lambda b, t: (b, 0, t)),
            pl.BlockSpec((1, Dc_p, tT), lambda b, t: (b, 0, t)),
            pl.BlockSpec((1, 1, tT), lambda b, t: (b, 0, t)),
            pl.BlockSpec((1, 1, tT), lambda b, t: (b, 0, t)),
        ),
        compiler_params=pltpu.CompilerParams(
            dimension_semantics=("parallel", "parallel"),
            vmem_limit_bytes=48 * 1024 * 1024),
        cost_estimate=pl.CostEstimate(flops=int(flops),
                                      transcendentals=int(B * T_p),
                                      bytes_accessed=int(bytes_accessed)),
    )(z_p, win_p, bin_p, cbn_p, c2_p, cbt_p, wout_p, bout_p)

    z_q = zq_p[:, :Din, :T]                               # (B, Din, T)
    z_e = ze_p[:, :Dc, :T]                                # (B, Dc, T)
    indices = idx_p[:, 0, :T]                             # (B, T)
    err = err_p[:, 0, :T]                                 # (B, T)
    commitment_loss = jnp.sum(err, axis=1) / (Dc * T)     # mean over dims [1, 2]
    codebook_loss = commitment_loss                       # identical forward value
    return z_q, commitment_loss, codebook_loss, indices, z_e


# ------------------------------ reference ---------------------------------


def _reference_forward(z, params):
    def wn(v, g):
        nrm = np.sqrt(np.sum(v * v, axis=1, keepdims=True))
        return v * (g[:, None] / nrm)

    z = np.asarray(z, np.float64)
    w_in = wn(np.asarray(params["in_v"], np.float64),
              np.asarray(params["in_g"], np.float64))
    w_out = wn(np.asarray(params["out_v"], np.float64),
               np.asarray(params["out_g"], np.float64))
    b_in = np.asarray(params["in_b"], np.float64)
    b_out = np.asarray(params["out_b"], np.float64)
    cb = np.asarray(params["codebook"], np.float64)

    B, Din, T = z.shape
    Dc = cb.shape[1]
    z_e = np.einsum("od,bdt->bot", w_in, z) + b_in[None, :, None]
    enc = z_e.transpose(0, 2, 1).reshape(B * T, Dc)

    def l2n(x):
        return x / np.maximum(np.sqrt((x * x).sum(-1, keepdims=True)), 1e-12)

    e_n, c_n = l2n(enc), l2n(cb)
    dist = (e_n ** 2).sum(1, keepdims=True) - 2.0 * e_n @ c_n.T \
        + (c_n ** 2).sum(1, keepdims=True).T
    idx = np.argmin(dist, axis=1)
    z_q = cb[idx].reshape(B, T, Dc).transpose(0, 2, 1)
    commit = ((z_e - z_q) ** 2).mean(axis=(1, 2))
    zq_out = np.einsum("od,bdt->bot", w_out, z_q) + b_out[None, :, None]
    return zq_out, commit, commit, idx.reshape(B, T), z_e


# --------------------------------- main ------------------------------------


if __name__ == "__main__":
    B, input_dim, T = 2, 32, 16
    codebook_size, codebook_dim = 64, 8

    key = jax.random.PRNGKey(0)
    ks = jax.random.split(key, 8)
    z = jax.random.normal(ks[0], (B, input_dim, T), jnp.float32)
    params = {
        "in_v": jax.random.normal(ks[1], (codebook_dim, input_dim), jnp.float32) * 0.2,
        "in_g": jax.random.normal(ks[2], (codebook_dim,), jnp.float32) * 0.1 + 1.0,
        "in_b": jax.random.normal(ks[3], (codebook_dim,), jnp.float32) * 0.1,
        "codebook": jax.random.normal(ks[4], (codebook_size, codebook_dim), jnp.float32),
        "out_v": jax.random.normal(ks[5], (input_dim, codebook_dim), jnp.float32) * 0.2,
        "out_g": jax.random.normal(ks[6], (input_dim,), jnp.float32) * 0.1 + 1.0,
        "out_b": jax.random.normal(ks[7], (input_dim,), jnp.float32) * 0.1,
    }

    fwd = jax.jit(vector_quantize_forward)
    z_q, commit, cb_loss, indices, z_e = jax.block_until_ready(fwd(z, params))

    r_zq, r_commit, r_cb, r_idx, r_ze = _reference_forward(
        np.asarray(z), {k: np.asarray(v) for k, v in params.items()})

    np.testing.assert_array_equal(np.asarray(indices), r_idx)
    np.testing.assert_allclose(np.asarray(z_e), r_ze, rtol=1e-4, atol=1e-4)
    np.testing.assert_allclose(np.asarray(z_q), r_zq, rtol=1e-4, atol=1e-4)
    np.testing.assert_allclose(np.asarray(commit), r_commit, rtol=1e-4, atol=1e-4)
    np.testing.assert_allclose(np.asarray(cb_loss), r_cb, rtol=1e-4, atol=1e-4)
    print("KERNEL_OK")
</pallas_src>

<mosaic_0001>
module attributes {stable_mosaic.version = 11 : i64} {
  func.func @_vq_kernel(%arg0: i32, %arg1: i32, %arg2: memref<1x128x128xf32, #tpu.memory_space<vmem>>, %arg3: memref<128x128xf32, #tpu.memory_space<vmem>>, %arg4: memref<128x1xf32, #tpu.memory_space<vmem>>, %arg5: memref<128x128xf32, #tpu.memory_space<vmem>>, %arg6: memref<128x1xf32, #tpu.memory_space<vmem>>, %arg7: memref<128x128xf32, #tpu.memory_space<vmem>>, %arg8: memref<128x128xf32, #tpu.memory_space<vmem>>, %arg9: memref<128x1xf32, #tpu.memory_space<vmem>>, %arg10: memref<1x128x128xf32, #tpu.memory_space<vmem>>, %arg11: memref<1x128x128xf32, #tpu.memory_space<vmem>>, %arg12: memref<1x1x128xi32, #tpu.memory_space<vmem>>, %arg13: memref<1x1x128xf32, #tpu.memory_space<vmem>>) attributes {dimension_semantics = [#tpu.dimension_semantics<parallel>, #tpu.dimension_semantics<parallel>], iteration_bounds = array<i64: 2, 1>, scalar_prefetch = 0 : i64, scratch_operands = 0 : i64, tpu.core_type = #tpu.core_type<tc>, window_params = [{transform_indices = @transform_0, window_bounds = array<i64: 1, 128, 128>}, {pipeline_mode = #tpu.pipeline_mode<synchronous>, transform_indices = @transform_1, window_bounds = array<i64: 128, 128>}, {pipeline_mode = #tpu.pipeline_mode<synchronous>, transform_indices = @transform_2, window_bounds = array<i64: 128, 1>}, {pipeline_mode = #tpu.pipeline_mode<synchronous>, transform_indices = @transform_3, window_bounds = array<i64: 128, 128>}, {pipeline_mode = #tpu.pipeline_mode<synchronous>, transform_indices = @transform_4, window_bounds = array<i64: 128, 1>}, {pipeline_mode = #tpu.pipeline_mode<synchronous>, transform_indices = @transform_5, window_bounds = array<i64: 128, 128>}, {pipeline_mode = #tpu.pipeline_mode<synchronous>, transform_indices = @transform_6, window_bounds = array<i64: 128, 128>}, {pipeline_mode = #tpu.pipeline_mode<synchronous>, transform_indices = @transform_7, window_bounds = array<i64: 128, 1>}, {transform_indices = @transform_8, window_bounds = array<i64: 1, 128, 128>}, {transform_indices = @transform_9, window_bounds = array<i64: 1, 128, 128>}, {transform_indices = @transform_10, window_bounds = array<i64: 1, 1, 128>}, {transform_indices = @transform_11, window_bounds = array<i64: 1, 1, 128>}]} {
    %c0 = arith.constant 0 : index
    %c0_0 = arith.constant 0 : index
    %c0_1 = arith.constant 0 : index
    %0 = vector.load %arg2[%c0, %c0_0, %c0_1] : memref<1x128x128xf32, #tpu.memory_space<vmem>>, vector<1x128x128xf32>
    %1 = vector.shape_cast %0 : vector<1x128x128xf32> to vector<128x128xf32>
    %c0_2 = arith.constant 0 : index
    %c0_3 = arith.constant 0 : index
    %2 = vector.load %arg3[%c0_2, %c0_3] : memref<128x128xf32, #tpu.memory_space<vmem>>, vector<128x128xf32>
    %cst = arith.constant dense<0.000000e+00> : vector<128x128xf32>
    %3 = tpu.matmul %2, %1, %cst {dimension_numbers = #tpu.dot_dimension_numbers<[1], [0], [0], [1], [0, 0, 1, 1], [], []>} : vector<128x128xf32>, vector<128x128xf32>, vector<128x128xf32> -> vector<128x128xf32>
    %c0_4 = arith.constant 0 : index
    %c0_5 = arith.constant 0 : index
    %4 = vector.load %arg4[%c0_4, %c0_5] : memref<128x1xf32, #tpu.memory_space<vmem>>, vector<128x1xf32>
    %5 = vector.broadcast %4 : vector<128x1xf32> to vector<128x128xf32>
    %6 = arith.addf %3, %5 : vector<128x128xf32>
    %c0_6 = arith.constant 0 : index
    %c0_7 = arith.constant 0 : index
    %c0_8 = arith.constant 0 : index
    %7 = vector.load %arg11[%c0_6, %c0_7, %c0_8] : memref<1x128x128xf32, #tpu.memory_space<vmem>>, vector<1x128x128xf32>
    %8 = vector.shape_cast %7 : vector<1x128x128xf32> to vector<128x128xf32>
    %9 = vector.shape_cast %6 : vector<128x128xf32> to vector<1x128x128xf32>
    tpu.vector_store %arg11[%c0_6, %c0_7, %c0_8], %9 {strides = array<i32>} : memref<1x128x128xf32, #tpu.memory_space<vmem>>, vector<1x128x128xf32>,
    %10 = arith.mulf %6, %6 : vector<128x128xf32>
    %cst_9 = arith.constant dense<0.000000e+00> : vector<128xf32>
    %11 = vector.multi_reduction <add>, %10, %cst_9 [0] : vector<128x128xf32> to vector<128xf32>
    %12 = vector.shape_cast %11 : vector<128xf32> to vector<1x128xf32>
    %13 = math.sqrt %12 : vector<1x128xf32>
    %cst_10 = arith.constant 9.99999996E-13 : f32
    %14 = vector.broadcast %cst_10 : f32 to vector<1x128xf32>
    %15 = arith.maximumf %13, %14 : vector<1x128xf32>
    %16 = vector.broadcast %15 : vector<1x128xf32> to vector<128x128xf32>
    %17 = arith.divf %6, %16 : vector<128x128xf32>
    %c0_11 = arith.constant 0 : index
    %c0_12 = arith.constant 0 : index
    %18 = vector.load %arg5[%c0_11, %c0_12] : memref<128x128xf32, #tpu.memory_space<vmem>>, vector<128x128xf32>
    %cst_13 = arith.constant dense<0.000000e+00> : vector<128x128xf32>
    %19 = tpu.matmul %18, %17, %cst_13 {dimension_numbers = #tpu.dot_dimension_numbers<[1], [0], [0], [1], [0, 0, 1, 1], [], []>} : vector<128x128xf32>, vector<128x128xf32>, vector<128x128xf32> -> vector<128x128xf32>
    %c0_14 = arith.constant 0 : index
    %c0_15 = arith.constant 0 : index
    %20 = vector.load %arg6[%c0_14, %c0_15] : memref<128x1xf32, #tpu.memory_space<vmem>>, vector<128x1xf32>
    %cst_16 = arith.constant 2.000000e+00 : f32
    %21 = vector.broadcast %cst_16 : f32 to vector<128x128xf32>
    %22 = arith.mulf %21, %19 : vector<128x128xf32>
    %23 = vector.broadcast %20 : vector<128x1xf32> to vector<128x128xf32>
    %24 = arith.subf %23, %22 : vector<128x128xf32>
    %cst_17 = arith.constant dense<0x7F800000> : vector<128xf32>
    %25 = vector.multi_reduction <minimumf>, %24, %cst_17 [0] : vector<128x128xf32> to vector<128xf32>
    %26 = vector.shape_cast %25 : vector<128xf32> to vector<1x128xf32>
    %27 = tpu.iota {dimensions = array<i32: 0>} : vector<128x128xi32>
    %28 = arith.sitofp %27 : vector<128x128xi32> to vector<128x128xf32>
    %29 = vector.broadcast %26 : vector<1x128xf32> to vector<128x128xf32>
    %30 = arith.cmpf oeq, %24, %29 : vector<128x128xf32>
    %cst_18 = arith.constant 1.280000e+02 : f32
    %31 = vector.broadcast %cst_18 : f32 to vector<128x128xf32>
    %32 = arith.select %30, %28, %31 : vector<128x128xi1>, vector<128x128xf32>
    %cst_19 = arith.constant dense<0x7F800000> : vector<128xf32>
    %33 = vector.multi_reduction <minimumf>, %32, %cst_19 [0] : vector<128x128xf32> to vector<128xf32>
    %34 = vector.shape_cast %33 : vector<128xf32> to vector<1x128xf32>
    %35 = arith.fptosi %34 : vector<1x128xf32> to vector<1x128xi32>
    %c0_20 = arith.constant 0 : index
    %c0_21 = arith.constant 0 : index
    %c0_22 = arith.constant 0 : index
    %36 = vector.load %arg12[%c0_20, %c0_21, %c0_22] : memref<1x1x128xi32, #tpu.memory_space<vmem>>, vector<1x1x128xi32>
    %37 = vector.shape_cast %36 : vector<1x1x128xi32> to vector<1x128xi32>
    %38 = vector.shape_cast %35 : vector<1x128xi32> to vector<1x1x128xi32>
    tpu.vector_store %arg12[%c0_20, %c0_21, %c0_22], %38 {strides = array<i32>} : memref<1x1x128xi32, #tpu.memory_space<vmem>>, vector<1x1x128xi32>,
    %39 = vector.broadcast %34 : vector<1x128xf32> to vector<128x128xf32>
    %40 = arith.cmpf oeq, %28, %39 : vector<128x128xf32>
    %41 = arith.extui %40 : vector<128x128xi1> to vector<128x128xi32>
    %42 = arith.sitofp %41 : vector<128x128xi32> to vector<128x128xf32>
    %c0_23 = arith.constant 0 : index
    %c0_24 = arith.constant 0 : index
    %43 = vector.load %arg7[%c0_23, %c0_24] : memref<128x128xf32, #tpu.memory_space<vmem>>, vector<128x128xf32>
    %cst_25 = arith.constant dense<0.000000e+00> : vector<128x128xf32>
    %44 = tpu.matmul %43, %42, %cst_25 {dimension_numbers = #tpu.dot_dimension_numbers<[1], [0], [0], [1], [0, 0, 1, 1], [], []>} : vector<128x128xf32>, vector<128x128xf32>, vector<128x128xf32> -> vector<128x128xf32>
    %45 = arith.subf %6, %44 : vector<128x128xf32>
    %46 = arith.mulf %45, %45 : vector<128x128xf32>
    %cst_26 = arith.constant dense<0.000000e+00> : vector<128xf32>
    %47 = vector.multi_reduction <add>, %46, %cst_26 [0] : vector<128x128xf32> to vector<128xf32>
    %48 = vector.shape_cast %47 : vector<128xf32> to vector<1x128xf32>
    %c0_27 = arith.constant 0 : index
    %c0_28 = arith.constant 0 : index
    %c0_29 = arith.constant 0 : index
    %49 = vector.load %arg13[%c0_27, %c0_28, %c0_29] : memref<1x1x128xf32, #tpu.memory_space<vmem>>, vector<1x1x128xf32>
    %50 = vector.shape_cast %49 : vector<1x1x128xf32> to vector<1x128xf32>
    %51 = vector.shape_cast %48 : vector<1x128xf32> to vector<1x1x128xf32>
    tpu.vector_store %arg13[%c0_27, %c0_28, %c0_29], %51 {strides = array<i32>} : memref<1x1x128xf32, #tpu.memory_space<vmem>>, vector<1x1x128xf32>,
    %c0_30 = arith.constant 0 : index
    %c0_31 = arith.constant 0 : index
    %52 = vector.load %arg8[%c0_30, %c0_31] : memref<128x128xf32, #tpu.memory_space<vmem>>, vector<128x128xf32>
    %cst_32 = arith.constant dense<0.000000e+00> : vector<128x128xf32>
    %53 = tpu.matmul %52, %44, %cst_32 {dimension_numbers = #tpu.dot_dimension_numbers<[1], [0], [0], [1], [0, 0, 1, 1], [], []>} : vector<128x128xf32>, vector<128x128xf32>, vector<128x128xf32> -> vector<128x128xf32>
    %c0_33 = arith.constant 0 : index
    %c0_34 = arith.constant 0 : index
    %54 = vector.load %arg9[%c0_33, %c0_34] : memref<128x1xf32, #tpu.memory_space<vmem>>, vector<128x1xf32>
    %55 = vector.broadcast %54 : vector<128x1xf32> to vector<128x128xf32>
    %56 = arith.addf %53, %55 : vector<128x128xf32>
    %c0_35 = arith.constant 0 : index
    %c0_36 = arith.constant 0 : index
    %c0_37 = arith.constant 0 : index
    %57 = vector.load %arg10[%c0_35, %c0_36, %c0_37] : memref<1x128x128xf32, #tpu.memory_space<vmem>>, vector<1x128x128xf32>
    %58 = vector.shape_cast %57 : vector<1x128x128xf32> to vector<128x128xf32>
    %59 = vector.shape_cast %56 : vector<128x128xf32> to vector<1x128x128xf32>
    tpu.vector_store %arg10[%c0_35, %c0_36, %c0_37], %59 {strides = array<i32>} : memref<1x128x128xf32, #tpu.memory_space<vmem>>, vector<1x128x128xf32>,
    return
  }
  func.func @transform_0(%arg0: i32, %arg1: i32) -> (i32, i32, i32) {
    %c0_i32 = arith.constant 0 : i32
    %c0_i32_0 = arith.constant 0 : i32
    return %arg0, %c0_i32, %arg1 : i32, i32, i32
  }
  func.func @transform_1(%arg0: i32, %arg1: i32) -> (i32, i32) {
    %c0_i32 = arith.constant 0 : i32
    %c0_i32_0 = arith.constant 0 : i32
    %c0_i32_1 = arith.constant 0 : i32
    return %c0_i32, %c0_i32_0 : i32, i32
  }
  func.func @transform_2(%arg0: i32, %arg1: i32) -> (i32, i32) {
    %c0_i32 = arith.constant 0 : i32
    %c0_i32_0 = arith.constant 0 : i32
    %c0_i32_1 = arith.constant 0 : i32
    return %c0_i32, %c0_i32_0 : i32, i32
  }
  func.func @transform_3(%arg0: i32, %arg1: i32) -> (i32, i32) {
    %c0_i32 = arith.constant 0 : i32
    %c0_i32_0 = arith.constant 0 : i32
    %c0_i32_1 = arith.constant 0 : i32
    return %c0_i32, %c0_i32_0 : i32, i32
  }
  func.func @transform_4(%arg0: i32, %arg1: i32) -> (i32, i32) {
    %c0_i32 = arith.constant 0 : i32
    %c0_i32_0 = arith.constant 0 : i32
    %c0_i32_1 = arith.constant 0 : i32
    return %c0_i32, %c0_i32_0 : i32, i32
  }
  func.func @transform_5(%arg0: i32, %arg1: i32) -> (i32, i32) {
    %c0_i32 = arith.constant 0 : i32
    %c0_i32_0 = arith.constant 0 : i32
    %c0_i32_1 = arith.constant 0 : i32
    return %c0_i32, %c0_i32_0 : i32, i32
  }
  func.func @transform_6(%arg0: i32, %arg1: i32) -> (i32, i32) {
    %c0_i32 = arith.constant 0 : i32
    %c0_i32_0 = arith.constant 0 : i32
    %c0_i32_1 = arith.constant 0 : i32
    return %c0_i32, %c0_i32_0 : i32, i32
  }
  func.func @transform_7(%arg0: i32, %arg1: i32) -> (i32, i32) {
    %c0_i32 = arith.constant 0 : i32
    %c0_i32_0 = arith.constant 0 : i32
    %c0_i32_1 = arith.constant 0 : i32
    return %c0_i32, %c0_i32_0 : i32, i32
  }
  func.func @transform_8(%arg0: i32, %arg1: i32) -> (i32, i32, i32) {
    %c0_i32 = arith.constant 0 : i32
    %c0_i32_0 = arith.constant 0 : i32
    return %arg0, %c0_i32, %arg1 : i32, i32, i32
  }
  func.func @transform_9(%arg0: i32, %arg1: i32) -> (i32, i32, i32) {
    %c0_i32 = arith.constant 0 : i32
    %c0_i32_0 = arith.constant 0 : i32
    return %arg0, %c0_i32, %arg1 : i32, i32, i32
  }
  func.func @transform_10(%arg0: i32, %arg1: i32) -> (i32, i32, i32) {
    %c0_i32 = arith.constant 0 : i32
    %c0_i32_0 = arith.constant 0 : i32
    return %arg0, %c0_i32, %arg1 : i32, i32, i32
  }
  func.func @transform_11(%arg0: i32, %arg1: i32) -> (i32, i32, i32) {
    %c0_i32 = arith.constant 0 : i32
    %c0_i32_0 = arith.constant 0 : i32
    return %arg0, %c0_i32, %arg1 : i32, i32, i32
  }
}

</mosaic_0001>

<llo_original>
// kernel: vector_quantize_forward.1
$region0: #{vector_quantize_forward.1}
  #allocation0 [shape = 'u32[]', space=smem, size = 0x4, offset = 0x4, fixed_abs, tag = 'smem constant byte address 0x4 - core index']
  #allocation1 [shape = 'u32[72,128]{1,0:T(1,128)}', space=vmem, size = 0x9000, scoped, tag = 'internal scratch']
  %s0 = inlined_call_operand.vmem [shape: f32[2,128,128], index: 0, kind: input, shape index: {}]
  %s1 = inlined_call_operand.vmem [shape: f32[128,128], index: 1, kind: input, shape index: {}]
  %s2 = inlined_call_operand.vmem [shape: f32[128,1], index: 2, kind: input, shape index: {}]
  %s3 = inlined_call_operand.vmem [shape: f32[128,128], index: 3, kind: input, shape index: {}]
  %s4 = inlined_call_operand.vmem [shape: f32[128,1], index: 4, kind: input, shape index: {}]
  %s5 = inlined_call_operand.vmem [shape: f32[128,128], index: 5, kind: input, shape index: {}]
  %s6 = inlined_call_operand.vmem [shape: f32[128,128], index: 6, kind: input, shape index: {}]
  %s7 = inlined_call_operand.vmem [shape: f32[128,1], index: 7, kind: input, shape index: {}]
  %s8 = inlined_call_operand.vmem [shape: f32[2,128,128], index: 8, kind: output, shape index: {0}]
  %s9 = inlined_call_operand.vmem [shape: f32[2,128,128], index: 9, kind: output, shape index: {1}]
  %s10 = inlined_call_operand.hbm [shape: s32[2,1,128], index: 10, kind: output, shape index: {2}]
  %s11 = inlined_call_operand.vmem [shape: f32[2,1,128], index: 11, kind: output, shape index: {3}]
  %12 = xla_tuple %s8, %s9, %s10, %s11
  %s13 = sld [smem:[#allocation0]]
  $region89: #{vector_quantize_forward.1} parent=0
    _
  %s15 = ssub.s32 1, %s13
  %s16 = scalar_select 0, %s15, %s13
  $region1: #{vector_quantize_forward.1} parent=0
    #allocation2 [shape = 'u8[1024]{0}', space=vmem, size = 0x400, scoped, tag = 'output window, operand 2']
    #allocation3 [shape = 's32[2]{0}', space=sflag, size = 0x8, scoped, tag = 'scoped memory for vector_quantize_forward.1']
    %17 = vsyncpa [#allocation3], 0
    %s18 = scalar_lea.sflag [#allocation3], 1
    %19 = vsyncpa %s18, 0
    loop: start=0, step=1, limit=4
    $region2: #{vector_quantize_forward.1} parent=1 // loop_pre_header
      _
    $region3: #{vector_quantize_forward.1} parent=1 // loop_header
      %s21 = sphi 0, %s25
      %p22 = scmp.ge.s32.totalorder %s21, 4
      %s28 = sphi 0, %s40
      %s29 = sphi 0, %s36
      %s30 = sphi 0, %s28
      %s31 = sphi 0, %s29
      %s32 = sphi 0, %s30
      %s33 = sphi 0, %s31
      %s45 = sphi 0, %s47
      %s48 = sphi 0, %s45
      %s49 = sphi 0, %s48
      %s65 = sphi 0, %s49
      %s69 = sphi 0, %s69
      %s71 = sphi 0, %s69
      %s72 = sphi 0, %s71
      %s86 = sphi 0, %s72
      %s90 = sphi 0, %s90
      %s92 = sphi 0, %s90
      %s93 = sphi 0, %s92
      %s107 = sphi 0, %s93
      %s111 = sphi 0, %s111
      %s113 = sphi 0, %s111
      %s114 = sphi 0, %s113
      %s128 = sphi 0, %s114
      %s132 = sphi 0, %s132
      %s134 = sphi 0, %s132
      %s135 = sphi 0, %s134
      %s149 = sphi 0, %s135
      %s153 = sphi 0, %s153
      %s155 = sphi 0, %s153
      %s156 = sphi 0, %s155
      %s170 = sphi 0, %s156
      %s174 = sphi 0, %s174
      %s176 = sphi 0, %s174
      %s177 = sphi 0, %s176
      %s191 = sphi 0, %s177
      %s195 = sphi 0, %s195
      %s197 = sphi 0, %s195
      %s198 = sphi 0, %s197
      %s212 = sphi 0, %s198
      %s220 = sphi 0, %s222
      %s223 = sphi 0, %s220
      %s224 = sphi 0, %s223
      %s240 = sphi 0, %s224
      %s248 = sphi 0, %s250
      %s251 = sphi 0, %s248
      %s252 = sphi 0, %s251
      %s268 = sphi 0, %s252
      %s276 = sphi 0, %s278
      %s279 = sphi 0, %s276
      %s280 = sphi 0, %s279
      %s296 = sphi 0, %s280
      %s304 = sphi 0, %s306
      %s307 = sphi 0, %s304
      %s308 = sphi 0, %s307
      %s324 = sphi 0, %s308
    $region4: #{vector_quantize_forward.1} parent=1 // loop_header_branch
      %24 = sbr.rel (%p22) target = $region8
    $region5: #{vector_quantize_forward.1} parent=1 // loop_body
      %s26 = ssub.s32 %s21, 1
      %s27 = ssub.s32 %s21, 2
      %s34 = sadd.s32 1, %s29
      %p35 = scmp.ge.s32.totalorder %s34, 1
      %s36 = scalar_select %p35, 0, %s34
      %s37 = sadd.s32 1, %s28
      %s38 = scalar_select %p35, %s37, %s28
      %p39 = scmp.ge.s32.totalorder %s38, 2
      %s40 = scalar_select %p39, 0, %s38
      %s41 = ssub.s32 %s28, %s40
      %s42 = ssub.s32 %s29, %s36
      %s43 = sor.u32 %s41, %s42
      %p44 = scmp.eq.s32.totalorder %s43, 0
      %s46 = sadd.s32 %s45, 1
      %s47 = scalar_select %p44, %s45, %s46
      %p50 = pneg %p44
      %p51 = scmp.eq.s32.totalorder %s21, 1
      %p52 = por %p50, %p51
      %p53 = scmp.ne.s32.totalorder %s45, %s48
      %p54 = scmp.eq.s32.totalorder %s21, 0
      %p55 = por %p53, %p54
      %p56 = scmp.ne.s32.totalorder %s45, %s48
      %p57 = scmp.eq.s32.totalorder %s26, 1
      %p58 = por %p56, %p57
      %p59 = scmp.ne.s32.totalorder %s48, %s49
      %p60 = scmp.eq.s32.totalorder %s26, 0
      %p61 = por %p59, %p60
      %p62 = scmp.ne.s32.totalorder %s48, %s49
      %p63 = scmp.eq.s32.totalorder %s27, 1
      %p64 = por %p62, %p63
      %p66 = scmp.ne.s32.totalorder %s49, %s65
      %p67 = scmp.eq.s32.totalorder %s27, 0
      %p68 = por %p66, %p67
      %s70 = sadd.s32 %s69, 1
      %p73 = scmp.eq.s32.totalorder %s21, 1
      %p74 = scmp.ne.s32.totalorder %s69, %s71
      %p75 = scmp.eq.s32.totalorder %s21, 0
      %p76 = por %p74, %p75
      %p77 = scmp.ne.s32.totalorder %s69, %s71
      %p78 = scmp.eq.s32.totalorder %s26, 1
      %p79 = por %p77, %p78
      %p80 = scmp.ne.s32.totalorder %s71, %s72
      %p81 = scmp.eq.s32.totalorder %s26, 0
      %p82 = por %p80, %p81
      %p83 = scmp.ne.s32.totalorder %s71, %s72
      %p84 = scmp.eq.s32.totalorder %s27, 1
      %p85 = por %p83, %p84
      %p87 = scmp.ne.s32.totalorder %s72, %s86
      %p88 = scmp.eq.s32.totalorder %s27, 0
      %p89 = por %p87, %p88
      %s91 = sadd.s32 %s90, 1
      %p94 = scmp.eq.s32.totalorder %s21, 1
      %p95 = scmp.ne.s32.totalorder %s90, %s92
      %p96 = scmp.eq.s32.totalorder %s21, 0
      %p97 = por %p95, %p96
      %p98 = scmp.ne.s32.totalorder %s90, %s92
      %p99 = scmp.eq.s32.totalorder %s26, 1
      %p100 = por %p98, %p99
      %p101 = scmp.ne.s32.totalorder %s92, %s93
      %p102 = scmp.eq.s32.totalorder %s26, 0
      %p103 = por %p101, %p102
      %p104 = scmp.ne.s32.totalorder %s92, %s93
      %p105 = scmp.eq.s32.totalorder %s27, 1
      %p106 = por %p104, %p105
      %p108 = scmp.ne.s32.totalorder %s93, %s107
      %p109 = scmp.eq.s32.totalorder %s27, 0
      %p110 = por %p108, %p109
      %s112 = sadd.s32 %s111, 1
      %p115 = scmp.eq.s32.totalorder %s21, 1
      %p116 = scmp.ne.s32.totalorder %s111, %s113
      %p117 = scmp.eq.s32.totalorder %s21, 0
      %p118 = por %p116, %p117
      %p119 = scmp.ne.s32.totalorder %s111, %s113
      %p120 = scmp.eq.s32.totalorder %s26, 1
      %p121 = por %p119, %p120
      %p122 = scmp.ne.s32.totalorder %s113, %s114
      %p123 = scmp.eq.s32.totalorder %s26, 0
      %p124 = por %p122, %p123
      %p125 = scmp.ne.s32.totalorder %s113, %s114
      %p126 = scmp.eq.s32.totalorder %s27, 1
      %p127 = por %p125, %p126
      %p129 = scmp.ne.s32.totalorder %s114, %s128
      %p130 = scmp.eq.s32.totalorder %s27, 0
      %p131 = por %p129, %p130
      %s133 = sadd.s32 %s132, 1
      %p136 = scmp.eq.s32.totalorder %s21, 1
      %p137 = scmp.ne.s32.totalorder %s132, %s134
      %p138 = scmp.eq.s32.totalorder %s21, 0
      %p139 = por %p137, %p138
      %p140 = scmp.ne.s32.totalorder %s132, %s134
      %p141 = scmp.eq.s32.totalorder %s26, 1
      %p142 = por %p140, %p141
      %p143 = scmp.ne.s32.totalorder %s134, %s135
      %p144 = scmp.eq.s32.totalorder %s26, 0
      %p145 = por %p143, %p144
      %p146 = scmp.ne.s32.totalorder %s134, %s135
      %p147 = scmp.eq.s32.totalorder %s27, 1
      %p148 = por %p146, %p147
      %p150 = scmp.ne.s32.totalorder %s135, %s149
      %p151 = scmp.eq.s32.totalorder %s27, 0
      %p152 = por %p150, %p151
      %s154 = sadd.s32 %s153, 1
      %p157 = scmp.eq.s32.totalorder %s21, 1
      %p158 = scmp.ne.s32.totalorder %s153, %s155
      %p159 = scmp.eq.s32.totalorder %s21, 0
      %p160 = por %p158, %p159
      %p161 = scmp.ne.s32.totalorder %s153, %s155
      %p162 = scmp.eq.s32.totalorder %s26, 1
      %p163 = por %p161, %p162
      %p164 = scmp.ne.s32.totalorder %s155, %s156
      %p165 = scmp.eq.s32.totalorder %s26, 0
      %p166 = por %p164, %p165
      %p167 = scmp.ne.s32.totalorder %s155, %s156
      %p168 = scmp.eq.s32.totalorder %s27, 1
      %p169 = por %p167, %p168
      %p171 = scmp.ne.s32.totalorder %s156, %s170
      %p172 = scmp.eq.s32.totalorder %s27, 0
      %p173 = por %p171, %p172
      %s175 = sadd.s32 %s174, 1
      %p178 = scmp.eq.s32.totalorder %s21, 1
      %p179 = scmp.ne.s32.totalorder %s174, %s176
      %p180 = scmp.eq.s32.totalorder %s21, 0
      %p181 = por %p179, %p180
      %p182 = scmp.ne.s32.totalorder %s174, %s176
      %p183 = scmp.eq.s32.totalorder %s26, 1
      %p184 = por %p182, %p183
      %p185 = scmp.ne.s32.totalorder %s176, %s177
      %p186 = scmp.eq.s32.totalorder %s26, 0
      %p187 = por %p185, %p186
      %p188 = scmp.ne.s32.totalorder %s176, %s177
      %p189 = scmp.eq.s32.totalorder %s27, 1
      %p190 = por %p188, %p189
      %p192 = scmp.ne.s32.totalorder %s177, %s191
      %p193 = scmp.eq.s32.totalorder %s27, 0
      %p194 = por %p192, %p193
      %s196 = sadd.s32 %s195, 1
      %p199 = scmp.eq.s32.totalorder %s21, 1
      %p200 = scmp.ne.s32.totalorder %s195, %s197
      %p201 = scmp.eq.s32.totalorder %s21, 0
      %p202 = por %p200, %p201
      %p203 = scmp.ne.s32.totalorder %s195, %s197
      %p204 = scmp.eq.s32.totalorder %s26, 1
      %p205 = por %p203, %p204
      %p206 = scmp.ne.s32.totalorder %s197, %s198
      %p207 = scmp.eq.s32.totalorder %s26, 0
      %p208 = por %p206, %p207
      %p209 = scmp.ne.s32.totalorder %s197, %s198
      %p210 = scmp.eq.s32.totalorder %s27, 1
      %p211 = por %p209, %p210
      %p213 = scmp.ne.s32.totalorder %s198, %s212
      %p214 = scmp.eq.s32.totalorder %s27, 0
      %p215 = por %p213, %p214
      %s216 = ssub.s32 %s28, %s40
      %s217 = ssub.s32 %s29, %s36
      %s218 = sor.u32 %s216, %s217
      %p219 = scmp.eq.s32.totalorder %s218, 0
      %s221 = sadd.s32 %s220, 1
      %s222 = scalar_select %p219, %s220, %s221
      %p225 = pneg %p219
      %p226 = scmp.eq.s32.totalorder %s21, 1
      %p227 = por %p225, %p226
      %p228 = scmp.ne.s32.totalorder %s220, %s223
      %p229 = scmp.eq.s32.totalorder %s21, 0
      %p230 = por %p228, %p229
      %p231 = scmp.ne.s32.totalorder %s220, %s223
      %p232 = scmp.eq.s32.totalorder %s26, 1
      %p233 = por %p231, %p232
      %p234 = scmp.ne.s32.totalorder %s223, %s224
      %p235 = scmp.eq.s32.totalorder %s26, 0
      %p236 = por %p234, %p235
      %p237 = scmp.ne.s32.totalorder %s223, %s224
      %p238 = scmp.eq.s32.totalorder %s27, 1
      %p239 = por %p237, %p238
      %p241 = scmp.ne.s32.totalorder %s224, %s240
      %p242 = scmp.eq.s32.totalorder %s27, 0
      %p243 = por %p241, %p242
      %s244 = ssub.s32 %s28, %s40
      %s245 = ssub.s32 %s29, %s36
      %s246 = sor.u32 %s244, %s245
      %p247 = scmp.eq.s32.totalorder %s246, 0
      %s249 = sadd.s32 %s248, 1
      %s250 = scalar_select %p247, %s248, %s249
      %p253 = pneg %p247
      %p254 = scmp.eq.s32.totalorder %s21, 1
      %p255 = por %p253, %p254
      %p256 = scmp.ne.s32.totalorder %s248, %s251
      %p257 = scmp.eq.s32.totalorder %s21, 0
      %p258 = por %p256, %p257
      %p259 = scmp.ne.s32.totalorder %s248, %s251
      %p260 = scmp.eq.s32.totalorder %s26, 1
      %p261 = por %p259, %p260
      %p262 = scmp.ne.s32.totalorder %s251, %s252
      %p263 = scmp.eq.s32.totalorder %s26, 0
      %p264 = por %p262, %p263
      %p265 = scmp.ne.s32.totalorder %s251, %s252
      %p266 = scmp.eq.s32.totalorder %s27, 1
      %p267 = por %p265, %p266
      %p269 = scmp.ne.s32.totalorder %s252, %s268
      %p270 = scmp.eq.s32.totalorder %s27, 0
      %p271 = por %p269, %p270
      %s272 = ssub.s32 %s28, %s40
      %s273 = ssub.s32 %s29, %s36
      %s274 = sor.u32 %s272, %s273
      %p275 = scmp.eq.s32.totalorder %s274, 0
      %s277 = sadd.s32 %s276, 1
      %s278 = scalar_select %p275, %s276, %s277
      %p281 = pneg %p275
      %p282 = scmp.eq.s32.totalorder %s21, 1
      %p283 = por %p281, %p282
      %p284 = scmp.ne.s32.totalorder %s276, %s279
      %p285 = scmp.eq.s32.totalorder %s21, 0
      %p286 = por %p284, %p285
      %p287 = scmp.ne.s32.totalorder %s276, %s279
      %p288 = scmp.eq.s32.totalorder %s26, 1
      %p289 = por %p287, %p288
      %p290 = scmp.ne.s32.totalorder %s279, %s280
      %p291 = scmp.eq.s32.totalorder %s26, 0
      %p292 = por %p290, %p291
      %p293 = scmp.ne.s32.totalorder %s279, %s280
      %p294 = scmp.eq.s32.totalorder %s27, 1
      %p295 = por %p293, %p294
      %p297 = scmp.ne.s32.totalorder %s280, %s296
      %p298 = scmp.eq.s32.totalorder %s27, 0
      %p299 = por %p297, %p298
      %s300 = ssub.s32 %s28, %s40
      %s301 = ssub.s32 %s29, %s36
      %s302 = sor.u32 %s300, %s301
      %p303 = scmp.eq.s32.totalorder %s302, 0
      %s305 = sadd.s32 %s304, 1
      %s306 = scalar_select %p303, %s304, %s305
      %p309 = pneg %p303
      %p310 = scmp.eq.s32.totalorder %s21, 1
      %p311 = por %p309, %p310
      %p312 = scmp.ne.s32.totalorder %s304, %s307
      %p313 = scmp.eq.s32.totalorder %s21, 0
      %p314 = por %p312, %p313
      %p315 = scmp.ne.s32.totalorder %s304, %s307
      %p316 = scmp.eq.s32.totalorder %s26, 1
      %p317 = por %p315, %p316
      %p318 = scmp.ne.s32.totalorder %s307, %s308
      %p319 = scmp.eq.s32.totalorder %s26, 0
      %p320 = por %p318, %p319
      %p321 = scmp.ne.s32.totalorder %s307, %s308
      %p322 = scmp.eq.s32.totalorder %s27, 1
      %p323 = por %p321, %p322
      %p325 = scmp.ne.s32.totalorder %s308, %s324
      %p326 = scmp.eq.s32.totalorder %s27, 0
      %p327 = por %p325, %p326
      %p328 = scmp.le.s32.totalorder 1, %s21
      %p329 = scmp.lt.s32.totalorder %s21, 3
      %p330 = pnand %p328, %p329
      %p331 = pneg %p330
      // Predicated region
      $region9: #{vector_quantize_forward.1} parent=5 // pred_check
        _
      $region10: #{vector_quantize_forward.1} parent=5 // pred_check_branch
        %333 = sbr.rel (%p330) target = $region12
      $region11: #{vector_quantize_forward.1} parent=5 // pred_region
        %s334 = ssub.s32 %s21, 1
        // Predicated region
        $region13: #{vector_quantize_forward.1} parent=11 // pred_check
          %p335 = pneg %p82
        $region14: #{vector_quantize_forward.1} parent=11 // pred_check_branch
          %337 = sbr.rel (%p335) target = $region16
        $region15: #{vector_quantize_forward.1} parent=11 // pred_region
          _
        $region16: #{vector_quantize_forward.1} parent=11 // pred_fallthru
          _
        // Predicated region
        $region17: #{vector_quantize_forward.1} parent=11 // pred_check
          %p338 = pneg %p103
        $region18: #{vector_quantize_forward.1} parent=11 // pred_check_branch
          %340 = sbr.rel (%p338) target = $region20
        $region19: #{vector_quantize_forward.1} parent=11 // pred_region
          _
        $region20: #{vector_quantize_forward.1} parent=11 // pred_fallthru
          _
        // Predicated region
        $region21: #{vector_quantize_forward.1} parent=11 // pred_check
          %p341 = pneg %p124
        $region22: #{vector_quantize_forward.1} parent=11 // pred_check_branch
          %343 = sbr.rel (%p341) target = $region24
        $region23: #{vector_quantize_forward.1} parent=11 // pred_region
          _
        $region24: #{vector_quantize_forward.1} parent=11 // pred_fallthru
          _
        // Predicated region
        $region25: #{vector_quantize_forward.1} parent=11 // pred_check
          %p344 = pneg %p145
        $region26: #{vector_quantize_forward.1} parent=11 // pred_check_branch
          %346 = sbr.rel (%p344) target = $region28
        $region27: #{vector_quantize_forward.1} parent=11 // pred_region
          _
        $region28: #{vector_quantize_forward.1} parent=11 // pred_fallthru
          _
        // Predicated region
        $region29: #{vector_quantize_forward.1} parent=11 // pred_check
          %p347 = pneg %p166
        $region30: #{vector_quantize_forward.1} parent=11 // pred_check_branch
          %349 = sbr.rel (%p347) target = $region32
        $region31: #{vector_quantize_forward.1} parent=11 // pred_region
          _
        $region32: #{vector_quantize_forward.1} parent=11 // pred_fallthru
          _
        // Predicated region
        $region33: #{vector_quantize_forward.1} parent=11 // pred_check
          %p350 = pneg %p187
        $region34: #{vector_quantize_forward.1} parent=11 // pred_check_branch
          %352 = sbr.rel (%p350) target = $region36
        $region35: #{vector_quantize_forward.1} parent=11 // pred_region
          _
        $region36: #{vector_quantize_forward.1} parent=11 // pred_fallthru
          _
        // Predicated region
        $region37: #{vector_quantize_forward.1} parent=11 // pred_check
          %p353 = pneg %p208
        $region38: #{vector_quantize_forward.1} parent=11 // pred_check_branch
          %355 = sbr.rel (%p353) target = $region40
        $region39: #{vector_quantize_forward.1} parent=11 // pred_region
          _
        $region40: #{vector_quantize_forward.1} parent=11 // pred_fallthru
          _
      $region12: #{vector_quantize_forward.1} parent=5 // pred_fallthru
        _
      %p356 = scmp.lt.s32.totalorder %s21, 2
      // Predicated region
      $region41: #{vector_quantize_forward.1} parent=5 // pred_check
        %p357 = pneg %p356
      $region42: #{vector_quantize_forward.1} parent=5 // pred_check_branch
        %359 = sbr.rel (%p357) target = $region44
      $region43: #{vector_quantize_forward.1} parent=5 // pred_region
        // Predicated region
        $region45: #{vector_quantize_forward.1} parent=43 // pred_check
          %p360 = pneg %p55
        $region46: #{vector_quantize_forward.1} parent=43 // pred_check_branch
          %362 = sbr.rel (%p360) target = $region48
        $region47: #{vector_quantize_forward.1} parent=43 // pred_region
          %p363 = scmp.lt.s32.totalorder %s28, 1
          %s364 = scalar_select %p363, %s28, 1
          %p365 = scmp.lt.s32.totalorder %s29, 0
          %s366 = scalar_select %p365, %s29, 0
          %s367 = smul.addr %s364, 16
          %s368 = sadd.s32 %s366, %s367
          %s369 = smul.addr %s368, 8
          %s370 = scalar_lea.vmem %s0, %s369
        $region48: #{vector_quantize_forward.1} parent=43 // pred_fallthru
          _
      $region44: #{vector_quantize_forward.1} parent=5 // pred_fallthru
        _
      %p371 = scmp.le.s32.totalorder 1, %s21
      %p372 = scmp.lt.s32.totalorder %s21, 3
      %p373 = pnand %p371, %p372
      %p374 = pneg %p373
      // Predicated region
      $region49: #{vector_quantize_forward.1} parent=5 // pred_check
        _
      $region50: #{vector_quantize_forward.1} parent=5 // pred_check_branch
        %376 = sbr.rel (%p373) target = $region52
      $region51: #{vector_quantize_forward.1} parent=5 // pred_region
        %s377 = ssub.s32 %s21, 1
        %p378 = scmp.lt.s32.totalorder %s30, 1
        %s379 = scalar_select %p378, %s30, 1
        %p380 = scmp.lt.s32.totalorder %s31, 0
        %s381 = scalar_select %p380, %s31, 0
        %s382 = smul.addr %s379, 16
        %s383 = sadd.s32 %s381, %s382
        %s384 = smul.addr %s383, 8
        %s385 = scalar_lea.vmem %s0, %s384
        %p386 = pneg %p61
        %p387 = pneg %p58
        %p388 = pneg %p82
        %p389 = pneg %p79
        %p390 = pneg %p103
        %p391 = pneg %p100
        %p392 = pneg %p124
        %p393 = pneg %p121
        %p394 = pneg %p145
        %p395 = pneg %p142
        %p396 = pneg %p166
        %p397 = pneg %p163
        %p398 = pneg %p187
        %p399 = pneg %p184
        %p400 = pneg %p208
        %p401 = pneg %p205
        %p402 = pneg %p236
        %p403 = pneg %p233
        %p404 = scmp.lt.s32.totalorder %s30, 1
        %s405 = scalar_select %p404, %s30, 1
        %p406 = scmp.lt.s32.totalorder %s31, 0
        %s407 = scalar_select %p406, %s31, 0
        %s408 = smul.addr %s405, 16
        %s409 = sadd.s32 %s407, %s408
        %s410 = smul.addr %s409, 8
        %s411 = scalar_lea.vmem %s8, %s410
        %p412 = pneg %p264
        %p413 = pneg %p261
        %p414 = scmp.lt.s32.totalorder %s30, 1
        %s415 = scalar_select %p414, %s30, 1
        %p416 = scmp.lt.s32.totalorder %s31, 0
        %s417 = scalar_select %p416, %s31, 0
        %s418 = smul.addr %s415, 16
        %s419 = sadd.s32 %s417, %s418
        %s420 = smul.addr %s419, 8
        %s421 = scalar_lea.vmem %s9, %s420
        %p422 = pneg %p292
        %p423 = pneg %p289
        %s424 = sand.u32 %s279, 1
        %s425 = scalar_lea.sflag [#allocation3], %s424
        %s426 = sand.u32 %s279, 1
        %s427 = scalar_lea.vmem [#allocation2], %s426
        %p428 = pneg %p320
        %p429 = pneg %p317
        %p430 = scmp.lt.s32.totalorder %s30, 1
        %s431 = scalar_select %p430, %s30, 1
        %p432 = scmp.lt.s32.totalorder %s31, 0
        %s433 = scalar_select %p432, %s31, 0
        %s434 = sadd.s32 %s433, %s431
        %s435 = scalar_lea.vmem %s11, %s434
        %p436 = scmp.lt.s32.totalorder %s30, 1
        %s437 = scalar_select %p436, %s30, 1
        %p438 = scmp.lt.s32.totalorder %s31, 0
        %s439 = scalar_select %p438, %s31, 0
        %s440 = smul.addr %s437, 16
        %s441 = sadd.s32 %s439, %s440
        %s442 = smul.addr %s441, 8
        %s443 = scalar_lea.vmem %s0, %s442
        %p444 = scmp.lt.s32.totalorder %s30, 1
        %s445 = scalar_select %p444, %s30, 1
        %p446 = scmp.lt.s32.totalorder %s31, 0
        %s447 = scalar_select %p446, %s31, 0
        %s448 = smul.addr %s445, 16
        %s449 = sadd.s32 %s447, %s448
        %s450 = smul.addr %s449, 8
        %s451 = scalar_lea.vmem %s8, %s450
        %p452 = scmp.lt.s32.totalorder %s30, 1
        %s453 = scalar_select %p452, %s30, 1
        %p454 = scmp.lt.s32.totalorder %s31, 0
        %s455 = scalar_select %p454, %s31, 0
        %s456 = smul.addr %s453, 16
        %s457 = sadd.s32 %s455, %s456
        %s458 = smul.addr %s457, 8
        %s459 = scalar_lea.vmem %s9, %s458
        %p460 = scmp.lt.s32.totalorder %s30, 1
        %s461 = scalar_select %p460, %s30, 1
        %p462 = scmp.lt.s32.totalorder %s31, 0
        %s463 = scalar_select %p462, %s31, 0
        %s464 = sadd.s32 %s463, %s461
        %s465 = scalar_lea.vmem %s11, %s464
        %v466 = vld [vmem:[%s443] sm:$0xff]
        %v467 = vld [vmem:[%s443 + $0x8] sm:$0xff]
        %v468 = vld [vmem:[%s443 + $0x10] sm:$0xff]
        %v469 = vld [vmem:[%s443 + $0x18] sm:$0xff]
        %v470 = vld [vmem:[%s443 + $0x20] sm:$0xff]
        %v471 = vld [vmem:[%s443 + $0x28] sm:$0xff]
        %v472 = vld [vmem:[%s443 + $0x30] sm:$0xff]
        %v473 = vld [vmem:[%s443 + $0x38] sm:$0xff]
        %v474 = vld [vmem:[%s443 + $0x40] sm:$0xff]
        %v475 = vld [vmem:[%s443 + $0x48] sm:$0xff]
        %v476 = vld [vmem:[%s443 + $0x50] sm:$0xff]
        %v477 = vld [vmem:[%s443 + $0x58] sm:$0xff]
        %v478 = vld [vmem:[%s443 + $0x60] sm:$0xff]
        %v479 = vld [vmem:[%s443 + $0x68] sm:$0xff]
        %v480 = vld [vmem:[%s443 + $0x70] sm:$0xff]
        %v481 = vld [vmem:[%s443 + $0x78] sm:$0xff]
        %v482 = vld [vmem:[%s1] sm:$0xff]
        %v483 = vld [vmem:[%s1 + $0x8] sm:$0xff]
        %v484 = vld [vmem:[%s1 + $0x10] sm:$0xff]
        %v485 = vld [vmem:[%s1 + $0x18] sm:$0xff]
        %v486 = vld [vmem:[%s1 + $0x20] sm:$0xff]
        %v487 = vld [vmem:[%s1 + $0x28] sm:$0xff]
        %v488 = vld [vmem:[%s1 + $0x30] sm:$0xff]
        %v489 = vld [vmem:[%s1 + $0x38] sm:$0xff]
        %v490 = vld [vmem:[%s1 + $0x40] sm:$0xff]
        %v491 = vld [vmem:[%s1 + $0x48] sm:$0xff]
        %v492 = vld [vmem:[%s1 + $0x50] sm:$0xff]
        %v493 = vld [vmem:[%s1 + $0x58] sm:$0xff]
        %v494 = vld [vmem:[%s1 + $0x60] sm:$0xff]
        %v495 = vld [vmem:[%s1 + $0x68] sm:$0xff]
        %v496 = vld [vmem:[%s1 + $0x70] sm:$0xff]
        %v497 = vld [vmem:[%s1 + $0x78] sm:$0xff]
        %v498 = vld [vmem:[%s2] sm:$0xff]
        %v499 = vld [vmem:[%s2 + $0x8] sm:$0xff]
        %v500 = vld [vmem:[%s2 + $0x10] sm:$0xff]
        %v501 = vld [vmem:[%s2 + $0x18] sm:$0xff]
        %v502 = vld [vmem:[%s2 + $0x20] sm:$0xff]
        %v503 = vld [vmem:[%s2 + $0x28] sm:$0xff]
        %v504 = vld [vmem:[%s2 + $0x30] sm:$0xff]
        %v505 = vld [vmem:[%s2 + $0x38] sm:$0xff]
        %v506 = vld [vmem:[%s2 + $0x40] sm:$0xff]
        %v507 = vld [vmem:[%s2 + $0x48] sm:$0xff]
        %v508 = vld [vmem:[%s2 + $0x50] sm:$0xff]
        %v509 = vld [vmem:[%s2 + $0x58] sm:$0xff]
        %v510 = vld [vmem:[%s2 + $0x60] sm:$0xff]
        %v511 = vld [vmem:[%s2 + $0x68] sm:$0xff]
        %v512 = vld [vmem:[%s2 + $0x70] sm:$0xff]
        %v513 = vld [vmem:[%s2 + $0x78] sm:$0xff]
        %515 = vset.pattern.permute.xlu0 0
        %516 = vperm.xlu0 %515, %v498
        %v517 = vpop.permute.xlu0 %516
        %520 = vset.pattern.permute.xlu0 0
        %521 = vperm.xlu0 %520, %v499
        %v522 = vpop.permute.xlu0 %521
        %525 = vset.pattern.permute.xlu0 0
        %526 = vperm.xlu0 %525, %v500
        %v527 = vpop.permute.xlu0 %526
        %530 = vset.pattern.permute.xlu0 0
        %531 = vperm.xlu0 %530, %v501
        %v532 = vpop.permute.xlu0 %531
        %535 = vset.pattern.permute.xlu0 0
        %536 = vperm.xlu0 %535, %v502
        %v537 = vpop.permute.xlu0 %536
        %540 = vset.pattern.permute.xlu0 0
        %541 = vperm.xlu0 %540, %v503
        %v542 = vpop.permute.xlu0 %541
        %545 = vset.pattern.permute.xlu0 0
        %546 = vperm.xlu0 %545, %v504
        %v547 = vpop.permute.xlu0 %546
        %550 = vset.pattern.permute.xlu0 0
        %551 = vperm.xlu0 %550, %v505
        %v552 = vpop.permute.xlu0 %551
        %555 = vset.pattern.permute.xlu0 0
        %556 = vperm.xlu0 %555, %v506
        %v557 = vpop.permute.xlu0 %556
        %560 = vset.pattern.permute.xlu0 0
        %561 = vperm.xlu0 %560, %v507
        %v562 = vpop.permute.xlu0 %561
        %565 = vset.pattern.permute.xlu0 0
        %566 = vperm.xlu0 %565, %v508
        %v567 = vpop.permute.xlu0 %566
        %570 = vset.pattern.permute.xlu0 0
        %571 = vperm.xlu0 %570, %v509
        %v572 = vpop.permute.xlu0 %571
        %575 = vset.pattern.permute.xlu0 0
        %576 = vperm.xlu0 %575, %v510
        %v577 = vpop.permute.xlu0 %576
        %580 = vset.pattern.permute.xlu0 0
        %581 = vperm.xlu0 %580, %v511
        %v582 = vpop.permute.xlu0 %581
        %585 = vset.pattern.permute.xlu0 0
        %586 = vperm.xlu0 %585, %v512
        %v587 = vpop.permute.xlu0 %586
        %590 = vset.pattern.permute.xlu0 0
        %591 = vperm.xlu0 %590, %v513
        %v592 = vpop.permute.xlu0 %591
        %594 = vmatpush.msra.mxu0 %v481
        %595 = vmatpush.msra.mxu0 %v480
        %596 = vmatpush.msra.mxu0 %v479
        %597 = vmatpush.msra.mxu0 %v478
        %598 = vmatpush.msra.mxu0 %v477
        %599 = vmatpush.msra.mxu0 %v476
        %600 = vmatpush.msra.mxu0 %v475
        %601 = vmatpush.msra.mxu0 %v474
        %602 = vmatpush.msra.mxu0 %v473
        %603 = vmatpush.msra.mxu0 %v472
        %604 = vmatpush.msra.mxu0 %v471
        %605 = vmatpush.msra.mxu0 %v470
        %606 = vmatpush.msra.mxu0 %v469
        %607 = vmatpush.msra.mxu0 %v468
        %608 = vmatpush.msra.mxu0 %v467
        %609 = vmatpush.msra.mxu0 %v466
        %610 = vmatmul.f32.gmra.mxu0 %v482
        %v611 = vpop.f32.mrf.mxu0
        %v612 = vadd.f32 %v517, %v611
        %613 = vmatmul.f32.gmra.mxu0 %v483
        %v614 = vpop.f32.mrf.mxu0
        %v615 = vadd.f32 %v522, %v614
        %616 = vmatmul.f32.gmra.mxu0 %v484
        %v617 = vpop.f32.mrf.mxu0
        %v618 = vadd.f32 %v527, %v617
        %619 = vmatmul.f32.gmra.mxu0 %v485
        %v620 = vpop.f32.mrf.mxu0
        %v621 = vadd.f32 %v532, %v620
        %622 = vmatmul.f32.gmra.mxu0 %v486
        %v623 = vpop.f32.mrf.mxu0
        %v624 = vadd.f32 %v537, %v623
        %625 = vmatmul.f32.gmra.mxu0 %v487
        %v626 = vpop.f32.mrf.mxu0
        %v627 = vadd.f32 %v542, %v626
        %628 = vmatmul.f32.gmra.mxu0 %v488
        %v629 = vpop.f32.mrf.mxu0
        %v630 = vadd.f32 %v547, %v629
        %631 = vmatmul.f32.gmra.mxu0 %v489
        %v632 = vpop.f32.mrf.mxu0
        %v633 = vadd.f32 %v552, %v632
        %634 = vmatmul.f32.gmra.mxu0 %v490
        %v635 = vpop.f32.mrf.mxu0
        %v636 = vadd.f32 %v557, %v635
        %637 = vmatmul.f32.gmra.mxu0 %v491
        %v638 = vpop.f32.mrf.mxu0
        %v639 = vadd.f32 %v562, %v638
        %640 = vmatmul.f32.gmra.mxu0 %v492
        %v641 = vpop.f32.mrf.mxu0
        %v642 = vadd.f32 %v567, %v641
        %643 = vmatmul.f32.gmra.mxu0 %v493
        %v644 = vpop.f32.mrf.mxu0
        %v645 = vadd.f32 %v572, %v644
        %646 = vmatmul.f32.gmra.mxu0 %v494
        %v647 = vpop.f32.mrf.mxu0
        %v648 = vadd.f32 %v577, %v647
        %649 = vmatmul.f32.gmra.mxu0 %v495
        %v650 = vpop.f32.mrf.mxu0
        %v651 = vadd.f32 %v582, %v650
        %652 = vmatmul.f32.gmra.mxu0 %v496
        %v653 = vpop.f32.mrf.mxu0
        %v654 = vadd.f32 %v587, %v653
        %655 = vmatmul.f32.gmra.mxu0 %v497
        %v656 = vpop.f32.mrf.mxu0
        %v657 = vadd.f32 %v592, %v656
        %658 = vdwg.mxu0
        %659 = vst [vmem:[%s459] sm:$0xff] %v612
        %660 = vst [vmem:[%s459 + $0x8] sm:$0xff] %v615
        %661 = vst [vmem:[%s459 + $0x10] sm:$0xff] %v618
        %662 = vst [vmem:[%s459 + $0x18] sm:$0xff] %v621
        %663 = vst [vmem:[%s459 + $0x20] sm:$0xff] %v624
        %664 = vst [vmem:[%s459 + $0x28] sm:$0xff] %v627
        %665 = vst [vmem:[%s459 + $0x30] sm:$0xff] %v630
        %666 = vst [vmem:[%s459 + $0x38] sm:$0xff] %v633
        %667 = vst [vmem:[%s459 + $0x40] sm:$0xff] %v636
        %668 = vst [vmem:[%s459 + $0x48] sm:$0xff] %v639
        %669 = vst [vmem:[%s459 + $0x50] sm:$0xff] %v642
        %670 = vst [vmem:[%s459 + $0x58] sm:$0xff] %v645
        %671 = vst [vmem:[%s459 + $0x60] sm:$0xff] %v648
        %672 = vst [vmem:[%s459 + $0x68] sm:$0xff] %v651
        %673 = vst [vmem:[%s459 + $0x70] sm:$0xff] %v654
        %674 = vst [vmem:[%s459 + $0x78] sm:$0xff] %v657
        %v675 = vmul.f32 %v612, %v612
        %v676 = vmul.f32 %v615, %v615
        %v677 = vmul.f32 %v618, %v618
        %v678 = vmul.f32 %v621, %v621
        %v679 = vmul.f32 %v624, %v624
        %v680 = vmul.f32 %v627, %v627
        %v681 = vmul.f32 %v630, %v630
        %v682 = vmul.f32 %v633, %v633
        %v683 = vmul.f32 %v636, %v636
        %v684 = vmul.f32 %v639, %v639
        %v685 = vmul.f32 %v642, %v642
        %v686 = vmul.f32 %v645, %v645
        %v687 = vmul.f32 %v648, %v648
        %v688 = vmul.f32 %v651, %v651
        %v689 = vmul.f32 %v654, %v654
        %v690 = vmul.f32 %v657, %v657
        %v691 = vadd.f32 %v675, %v676
        %v692 = vadd.f32 %v691, %v677
        %v693 = vadd.f32 %v692, %v678
        %v694 = vadd.f32 %v693, %v679
        %v695 = vadd.f32 %v694, %v680
        %v696 = vadd.f32 %v695, %v681
        %v697 = vadd.f32 %v696, %v682
        %v698 = vadd.f32 %v697, %v683
        %v699 = vadd.f32 %v698, %v684
        %v700 = vadd.f32 %v699, %v685
        %v701 = vadd.f32 %v700, %v686
        %v702 = vadd.f32 %v701, %v687
        %v703 = vadd.f32 %v702, %v688
        %v704 = vadd.f32 %v703, %v689
        %v705 = vadd.f32 %v704, %v690
        %v706 = vrot.slane %v705, 4
        %v707 = vadd.f32 %v705, %v706
        %v708 = vrot.slane %v707, 2
        %v709 = vadd.f32 %v707, %v708
        %v710 = vrot.slane %v709, 1
        %v711 = vadd.f32 %v709, %v710
        %v712 = vrsqrt.pop %v711
        %v713 = vmul.f32 %v712, %v711
        %v714 = vmul.f32 %v713, %v712
        %v715 = vmul.f32 0.5, %v714
        %v716 = vsub.f32 1.5, %v715
        %v717 = vmul.f32 %v712, %v716
        %v718 = vmul.f32 %v711, %v717
        %vm719 = vcmp.eq.f32.partialorder %v711, inf
        %v720 = vsel %vm719, %v711, %v718
        %vm721 = vcmp.eq.f32.partialorder %v711, 0.0
        %v722 = vand.u32 %v711, 2147483648
        %v723 = vsel %vm721, %v722, %v720
        %v724 = vmax.f32 %v723, 1e-12
        %v725 = vrcp.pop %v724
        %v726 = vmul.f32 %v724, %v725
        %v727 = vsub.f32 1.0, %v726
        %v728 = vmul.f32 %v725, %v727
        %v729 = vadd.f32 %v725, %v728
        %vm730 = vweird.f32 %v724
        %vm731 = vweird.f32 %v725
        %vm732 = vmor %vm730, %vm731
        %v733 = vsel %vm732, %v725, %v729
        %v734 = vand.u32 2147483647, %v724
        %vm735 = vcmp.eq.f32.partialorder %v734, 8.507059e+37
        %v736 = vand.u32 %v724, 2147483648
        %v737 = vor.u32 1.1754944e-38, %v736
        %v738 = vsel %vm735, %v737, %v733
        %v739 = vmul.f32 %v612, %v738
        %v740 = vmul.f32 %v615, %v738
        %v741 = vmul.f32 %v618, %v738
        %v742 = vmul.f32 %v621, %v738
        %v743 = vmul.f32 %v624, %v738
        %v744 = vmul.f32 %v627, %v738
        %v745 = vmul.f32 %v630, %v738
        %v746 = vmul.f32 %v633, %v738
        %v747 = vmul.f32 %v636, %v738
        %v748 = vmul.f32 %v639, %v738
        %v749 = vmul.f32 %v642, %v738
        %v750 = vmul.f32 %v645, %v738
        %v751 = vmul.f32 %v648, %v738
        %v752 = vmul.f32 %v651, %v738
        %v753 = vmul.f32 %v654, %v738
        %v754 = vmul.f32 %v657, %v738
        %v755 = vld [vmem:[%s3] sm:$0xff]
        %v756 = vld [vmem:[%s3 + $0x8] sm:$0xff]
        %v757 = vld [vmem:[%s3 + $0x10] sm:$0xff]
        %v758 = vld [vmem:[%s3 + $0x18] sm:$0xff]
        %v759 = vld [vmem:[%s3 + $0x20] sm:$0xff]
        %v760 = vld [vmem:[%s3 + $0x28] sm:$0xff]
        %v761 = vld [vmem:[%s3 + $0x30] sm:$0xff]
        %v762 = vld [vmem:[%s3 + $0x38] sm:$0xff]
        %v763 = vld [vmem:[%s3 + $0x40] sm:$0xff]
        %v764 = vld [vmem:[%s3 + $0x48] sm:$0xff]
        %v765 = vld [vmem:[%s3 + $0x50] sm:$0xff]
        %v766 = vld [vmem:[%s3 + $0x58] sm:$0xff]
        %v767 = vld [vmem:[%s3 + $0x60] sm:$0xff]
        %v768 = vld [vmem:[%s3 + $0x68] sm:$0xff]
        %v769 = vld [vmem:[%s3 + $0x70] sm:$0xff]
        %v770 = vld [vmem:[%s3 + $0x78] sm:$0xff]
        %771 = vmatpush.msra.mxu0 %v754
        %772 = vmatpush.msra.mxu0 %v753
        %773 = vmatpush.msra.mxu0 %v752
        %774 = vmatpush.msra.mxu0 %v751
        %775 = vmatpush.msra.mxu0 %v750
        %776 = vmatpush.msra.mxu0 %v749
        %777 = vmatpush.msra.mxu0 %v748
        %778 = vmatpush.msra.mxu0 %v747
        %779 = vmatpush.msra.mxu0 %v746
        %780 = vmatpush.msra.mxu0 %v745
        %781 = vmatpush.msra.mxu0 %v744
        %782 = vmatpush.msra.mxu0 %v743
        %783 = vmatpush.msra.mxu0 %v742
        %784 = vmatpush.msra.mxu0 %v741
        %785 = vmatpush.msra.mxu0 %v740
        %786 = vmatpush.msra.mxu0 %v739
        %787 = vmatmul.f32.gmra.mxu0 %v755
        %v788 = vpop.f32.mrf.mxu0
        %v789 = vadd.f32 0.0, %v788
        %790 = vmatmul.f32.gmra.mxu0 %v756
        %v791 = vpop.f32.mrf.mxu0
        %v792 = vadd.f32 0.0, %v791
        %793 = vmatmul.f32.gmra.mxu0 %v757
        %v794 = vpop.f32.mrf.mxu0
        %v795 = vadd.f32 0.0, %v794
        %796 = vmatmul.f32.gmra.mxu0 %v758
        %v797 = vpop.f32.mrf.mxu0
        %v798 = vadd.f32 0.0, %v797
        %799 = vmatmul.f32.gmra.mxu0 %v759
        %v800 = vpop.f32.mrf.mxu0
        %v801 = vadd.f32 0.0, %v800
        %802 = vmatmul.f32.gmra.mxu0 %v760
        %v803 = vpop.f32.mrf.mxu0
        %v804 = vadd.f32 0.0, %v803
        %805 = vmatmul.f32.gmra.mxu0 %v761
        %v806 = vpop.f32.mrf.mxu0
        %v807 = vadd.f32 0.0, %v806
        %808 = vmatmul.f32.gmra.mxu0 %v762
        %v809 = vpop.f32.mrf.mxu0
        %v810 = vadd.f32 0.0, %v809
        %811 = vmatmul.f32.gmra.mxu0 %v763
        %v812 = vpop.f32.mrf.mxu0
        %v813 = vadd.f32 0.0, %v812
        %814 = vmatmul.f32.gmra.mxu0 %v764
        %v815 = vpop.f32.mrf.mxu0
        %v816 = vadd.f32 0.0, %v815
        %817 = vmatmul.f32.gmra.mxu0 %v765
        %v818 = vpop.f32.mrf.mxu0
        %v819 = vadd.f32 0.0, %v818
        %820 = vmatmul.f32.gmra.mxu0 %v766
        %v821 = vpop.f32.mrf.mxu0
        %v822 = vadd.f32 0.0, %v821
        %823 = vmatmul.f32.gmra.mxu0 %v767
        %v824 = vpop.f32.mrf.mxu0
        %v825 = vadd.f32 0.0, %v824
        %826 = vmatmul.f32.gmra.mxu0 %v768
        %v827 = vpop.f32.mrf.mxu0
        %v828 = vadd.f32 0.0, %v827
        %829 = vmatmul.f32.gmra.mxu0 %v769
        %v830 = vpop.f32.mrf.mxu0
        %v831 = vadd.f32 0.0, %v830
        %832 = vmatmul.f32.gmra.mxu0 %v770
        %v833 = vpop.f32.mrf.mxu0
        %v834 = vadd.f32 0.0, %v833
        %835 = vdwg.mxu0
        %v836 = vld [vmem:[%s4] sm:$0xff]
        %v837 = vld [vmem:[%s4 + $0x8] sm:$0xff]
        %v838 = vld [vmem:[%s4 + $0x10] sm:$0xff]
        %v839 = vld [vmem:[%s4 + $0x18] sm:$0xff]
        %v840 = vld [vmem:[%s4 + $0x20] sm:$0xff]
        %v841 = vld [vmem:[%s4 + $0x28] sm:$0xff]
        %v842 = vld [vmem:[%s4 + $0x30] sm:$0xff]
        %v843 = vld [vmem:[%s4 + $0x38] sm:$0xff]
        %v844 = vld [vmem:[%s4 + $0x40] sm:$0xff]
        %v845 = vld [vmem:[%s4 + $0x48] sm:$0xff]
        %v846 = vld [vmem:[%s4 + $0x50] sm:$0xff]
        %v847 = vld [vmem:[%s4 + $0x58] sm:$0xff]
        %v848 = vld [vmem:[%s4 + $0x60] sm:$0xff]
        %v849 = vld [vmem:[%s4 + $0x68] sm:$0xff]
        %v850 = vld [vmem:[%s4 + $0x70] sm:$0xff]
        %v851 = vld [vmem:[%s4 + $0x78] sm:$0xff]
        %v852 = vmul.f32 %v789, 2.0
        %v853 = vmul.f32 %v792, 2.0
        %v854 = vmul.f32 %v795, 2.0
        %v855 = vmul.f32 %v798, 2.0
        %v856 = vmul.f32 %v801, 2.0
        %v857 = vmul.f32 %v804, 2.0
        %v858 = vmul.f32 %v807, 2.0
        %v859 = vmul.f32 %v810, 2.0
        %v860 = vmul.f32 %v813, 2.0
        %v861 = vmul.f32 %v816, 2.0
        %v862 = vmul.f32 %v819, 2.0
        %v863 = vmul.f32 %v822, 2.0
        %v864 = vmul.f32 %v825, 2.0
        %v865 = vmul.f32 %v828, 2.0
        %v866 = vmul.f32 %v831, 2.0
        %v867 = vmul.f32 %v834, 2.0
        %869 = vset.pattern.permute.xlu0 0
        %870 = vperm.xlu0 %869, %v836
        %v871 = vpop.permute.xlu0 %870
        %874 = vset.pattern.permute.xlu0 0
        %875 = vperm.xlu0 %874, %v837
        %v876 = vpop.permute.xlu0 %875
        %879 = vset.pattern.permute.xlu0 0
        %880 = vperm.xlu0 %879, %v838
        %v881 = vpop.permute.xlu0 %880
        %884 = vset.pattern.permute.xlu0 0
        %885 = vperm.xlu0 %884, %v839
        %v886 = vpop.permute.xlu0 %885
        %889 = vset.pattern.permute.xlu0 0
        %890 = vperm.xlu0 %889, %v840
        %v891 = vpop.permute.xlu0 %890
        %894 = vset.pattern.permute.xlu0 0
        %895 = vperm.xlu0 %894, %v841
        %v896 = vpop.permute.xlu0 %895
        %899 = vset.pattern.permute.xlu0 0
        %900 = vperm.xlu0 %899, %v842
        %v901 = vpop.permute.xlu0 %900
        %904 = vset.pattern.permute.xlu0 0
        %905 = vperm.xlu0 %904, %v843
        %v906 = vpop.permute.xlu0 %905
        %909 = vset.pattern.permute.xlu0 0
        %910 = vperm.xlu0 %909, %v844
        %v911 = vpop.permute.xlu0 %910
        %914 = vset.pattern.permute.xlu0 0
        %915 = vperm.xlu0 %914, %v845
        %v916 = vpop.permute.xlu0 %915
        %919 = vset.pattern.permute.xlu0 0
        %920 = vperm.xlu0 %919, %v846
        %v921 = vpop.permute.xlu0 %920
        %924 = vset.pattern.permute.xlu0 0
        %925 = vperm.xlu0 %924, %v847
        %v926 = vpop.permute.xlu0 %925
        %929 = vset.pattern.permute.xlu0 0
        %930 = vperm.xlu0 %929, %v848
        %v931 = vpop.permute.xlu0 %930
        %934 = vset.pattern.permute.xlu0 0
        %935 = vperm.xlu0 %934, %v849
        %v936 = vpop.permute.xlu0 %935
        %939 = vset.pattern.permute.xlu0 0
        %940 = vperm.xlu0 %939, %v850
        %v941 = vpop.permute.xlu0 %940
        %944 = vset.pattern.permute.xlu0 0
        %945 = vperm.xlu0 %944, %v851
        %v946 = vpop.permute.xlu0 %945
        %v948 = vsub.f32 %v871, %v852
        %v949 = vsub.f32 %v876, %v853
        %v950 = vsub.f32 %v881, %v854
        %v951 = vsub.f32 %v886, %v855
        %v952 = vsub.f32 %v891, %v856
        %v953 = vsub.f32 %v896, %v857
        %v954 = vsub.f32 %v901, %v858
        %v955 = vsub.f32 %v906, %v859
        %v956 = vsub.f32 %v911, %v860
        %v957 = vsub.f32 %v916, %v861
        %v958 = vsub.f32 %v921, %v862
        %v959 = vsub.f32 %v926, %v863
        %v960 = vsub.f32 %v931, %v864
        %v961 = vsub.f32 %v936, %v865
        %v962 = vsub.f32 %v941, %v866
        %v963 = vsub.f32 %v946, %v867
        %v964 = vmin.f32 %v948, %v952
        %v965 = vmin.f32 %v949, %v953
        %v966 = vmin.f32 %v950, %v954
        %v967 = vmin.f32 %v951, %v955
        %v968 = vmin.f32 %v964, %v956
        %v969 = vmin.f32 %v965, %v957
        %v970 = vmin.f32 %v966, %v958
        %v971 = vmin.f32 %v967, %v959
        %v972 = vmin.f32 %v968, %v960
        %v973 = vmin.f32 %v969, %v961
        %v974 = vmin.f32 %v970, %v962
        %v975 = vmin.f32 %v971, %v963
        %v976 = vmin.f32 %v972, %v973
        %v977 = vmin.f32 %v974, %v975
        %v978 = vmin.f32 %v976, %v977
        %v979 = vrot.slane %v978, 4
        %v980 = vmin.f32 %v978, %v979
        %v981 = vrot.slane %v980, 2
        %v982 = vmin.f32 %v980, %v981
        %v983 = vrot.slane %v982, 1
        %v984 = vmin.f32 %v982, %v983
        %v985 = vlaneseq
        %v986 = vshrl.u32 %v985, 7
        %v987 = vadd.s32 %v986, 8
        %v988 = vadd.s32 %v986, 16
        %v989 = vadd.s32 %v986, 24
        %v990 = vadd.s32 %v986, 32
        %v991 = vadd.s32 %v986, 40
        %v992 = vadd.s32 %v986, 48
        %v993 = vadd.s32 %v986, 56
        %v994 = vadd.s32 %v986, 64
        %v995 = vadd.s32 %v986, 72
        %v996 = vadd.s32 %v986, 80
        %v997 = vadd.s32 %v986, 88
        %v998 = vadd.s32 %v986, 96
        %v999 = vadd.s32 %v986, 104
        %v1000 = vadd.s32 %v986, 112
        %v1001 = vadd.s32 %v986, 120
        %v1002 = vcvt.s32.f32 %v986
        %v1003 = vcvt.s32.f32 %v987
        %v1004 = vcvt.s32.f32 %v988
        %v1005 = vcvt.s32.f32 %v989
        %v1006 = vcvt.s32.f32 %v990
        %v1007 = vcvt.s32.f32 %v991
        %v1008 = vcvt.s32.f32 %v992
        %v1009 = vcvt.s32.f32 %v993
        %v1010 = vcvt.s32.f32 %v994
        %v1011 = vcvt.s32.f32 %v995
        %v1012 = vcvt.s32.f32 %v996
        %v1013 = vcvt.s32.f32 %v997
        %v1014 = vcvt.s32.f32 %v998
        %v1015 = vcvt.s32.f32 %v999
        %v1016 = vcvt.s32.f32 %v1000
        %v1017 = vcvt.s32.f32 %v1001
        %vm1018 = vcmp.eq.f32.partialorder %v948, %v984
        %vm1019 = vcmp.eq.f32.partialorder %v949, %v984
        %vm1020 = vcmp.eq.f32.partialorder %v950, %v984
        %vm1021 = vcmp.eq.f32.partialorder %v951, %v984
        %vm1022 = vcmp.eq.f32.partialorder %v952, %v984
        %vm1023 = vcmp.eq.f32.partialorder %v953, %v984
        %vm1024 = vcmp.eq.f32.partialorder %v954, %v984
        %vm1025 = vcmp.eq.f32.partialorder %v955, %v984
        %vm1026 = vcmp.eq.f32.partialorder %v956, %v984
        %vm1027 = vcmp.eq.f32.partialorder %v957, %v984
        %vm1028 = vcmp.eq.f32.partialorder %v958, %v984
        %vm1029 = vcmp.eq.f32.partialorder %v959, %v984
        %vm1030 = vcmp.eq.f32.partialorder %v960, %v984
        %vm1031 = vcmp.eq.f32.partialorder %v961, %v984
        %vm1032 = vcmp.eq.f32.partialorder %v962, %v984
        %vm1033 = vcmp.eq.f32.partialorder %v963, %v984
        %v1034 = vsel %vm1018, %v1002, 128.0
        %v1035 = vsel %vm1019, %v1003, 128.0
        %v1036 = vsel %vm1020, %v1004, 128.0
        %v1037 = vsel %vm1021, %v1005, 128.0
        %v1038 = vsel %vm1022, %v1006, 128.0
        %v1039 = vsel %vm1023, %v1007, 128.0
        %v1040 = vsel %vm1024, %v1008, 128.0
        %v1041 = vsel %vm1025, %v1009, 128.0
        %v1042 = vsel %vm1026, %v1010, 128.0
        %v1043 = vsel %vm1027, %v1011, 128.0
        %v1044 = vsel %vm1028, %v1012, 128.0
        %v1045 = vsel %vm1029, %v1013, 128.0
        %v1046 = vsel %vm1030, %v1014, 128.0
        %v1047 = vsel %vm1031, %v1015, 128.0
        %v1048 = vsel %vm1032, %v1016, 128.0
        %v1049 = vsel %vm1033, %v1017, 128.0
        %v1050 = vmin.f32 %v1034, %v1038
        %v1051 = vmin.f32 %v1035, %v1039
        %v1052 = vmin.f32 %v1036, %v1040
        %v1053 = vmin.f32 %v1037, %v1041
        %v1054 = vmin.f32 %v1050, %v1042
        %v1055 = vmin.f32 %v1051, %v1043
        %v1056 = vmin.f32 %v1052, %v1044
        %v1057 = vmin.f32 %v1053, %v1045
        %v1058 = vmin.f32 %v1054, %v1046
        %v1059 = vmin.f32 %v1055, %v1047
        %v1060 = vmin.f32 %v1056, %v1048
        %v1061 = vmin.f32 %v1057, %v1049
        %v1062 = vmin.f32 %v1058, %v1059
        %v1063 = vmin.f32 %v1060, %v1061
        %v1064 = vmin.f32 %v1062, %v1063
        %v1065 = vrot.slane %v1064, 4
        %v1066 = vmin.f32 %v1064, %v1065
        %v1067 = vrot.slane %v1066, 2
        %v1068 = vmin.f32 %v1066, %v1067
        %v1069 = vrot.slane %v1068, 1
        %v1070 = vmin.f32 %v1068, %v1069
        %v1071 = vcvt.f32.s32.to.zero.pseudo %v1070
        %1072 = vst [vmem:[%s427] sm:$0x1] %v1071
        %vm1073 = vcmp.eq.f32.partialorder %v1002, %v1070
        %vm1074 = vcmp.eq.f32.partialorder %v1003, %v1070
        %vm1075 = vcmp.eq.f32.partialorder %v1004, %v1070
        %vm1076 = vcmp.eq.f32.partialorder %v1005, %v1070
        %vm1077 = vcmp.eq.f32.partialorder %v1006, %v1070
        %vm1078 = vcmp.eq.f32.partialorder %v1007, %v1070
        %vm1079 = vcmp.eq.f32.partialorder %v1008, %v1070
        %vm1080 = vcmp.eq.f32.partialorder %v1009, %v1070
        %vm1081 = vcmp.eq.f32.partialorder %v1010, %v1070
        %vm1082 = vcmp.eq.f32.partialorder %v1011, %v1070
        %vm1083 = vcmp.eq.f32.partialorder %v1012, %v1070
        %vm1084 = vcmp.eq.f32.partialorder %v1013, %v1070
        %vm1085 = vcmp.eq.f32.partialorder %v1014, %v1070
        %vm1086 = vcmp.eq.f32.partialorder %v1015, %v1070
        %vm1087 = vcmp.eq.f32.partialorder %v1016, %v1070
        %vm1088 = vcmp.eq.f32.partialorder %v1017, %v1070
        %v1089 = vsel %vm1073, 1, 0
        %v1090 = vsel %vm1074, 1, 0
        %v1091 = vsel %vm1075, 1, 0
        %v1092 = vsel %vm1076, 1, 0
        %v1093 = vsel %vm1077, 1, 0
        %v1094 = vsel %vm1078, 1, 0
        %v1095 = vsel %vm1079, 1, 0
        %v1096 = vsel %vm1080, 1, 0
        %v1097 = vsel %vm1081, 1, 0
        %v1098 = vsel %vm1082, 1, 0
        %v1099 = vsel %vm1083, 1, 0
        %v1100 = vsel %vm1084, 1, 0
        %v1101 = vsel %vm1085, 1, 0
        %v1102 = vsel %vm1086, 1, 0
        %v1103 = vsel %vm1087, 1, 0
        %v1104 = vsel %vm1088, 1, 0
        %v1105 = vcvt.s32.f32 %v1089
        %v1106 = vcvt.s32.f32 %v1090
        %v1107 = vcvt.s32.f32 %v1091
        %v1108 = vcvt.s32.f32 %v1092
        %v1109 = vcvt.s32.f32 %v1093
        %v1110 = vcvt.s32.f32 %v1094
        %v1111 = vcvt.s32.f32 %v1095
        %v1112 = vcvt.s32.f32 %v1096
        %v1113 = vcvt.s32.f32 %v1097
        %v1114 = vcvt.s32.f32 %v1098
        %v1115 = vcvt.s32.f32 %v1099
        %v1116 = vcvt.s32.f32 %v1100
        %v1117 = vcvt.s32.f32 %v1101
        %v1118 = vcvt.s32.f32 %v1102
        %v1119 = vcvt.s32.f32 %v1103
        %v1120 = vcvt.s32.f32 %v1104
        %v1121 = vld [vmem:[%s5] sm:$0xff]
        %v1122 = vld [vmem:[%s5 + $0x8] sm:$0xff]
        %v1123 = vld [vmem:[%s5 + $0x10] sm:$0xff]
        %v1124 = vld [vmem:[%s5 + $0x18] sm:$0xff]
        %v1125 = vld [vmem:[%s5 + $0x20] sm:$0xff]
        %v1126 = vld [vmem:[%s5 + $0x28] sm:$0xff]
        %v1127 = vld [vmem:[%s5 + $0x30] sm:$0xff]
        %v1128 = vld [vmem:[%s5 + $0x38] sm:$0xff]
        %v1129 = vld [vmem:[%s5 + $0x40] sm:$0xff]
        %v1130 = vld [vmem:[%s5 + $0x48] sm:$0xff]
        %v1131 = vld [vmem:[%s5 + $0x50] sm:$0xff]
        %v1132 = vld [vmem:[%s5 + $0x58] sm:$0xff]
        %v1133 = vld [vmem:[%s5 + $0x60] sm:$0xff]
        %v1134 = vld [vmem:[%s5 + $0x68] sm:$0xff]
        %v1135 = vld [vmem:[%s5 + $0x70] sm:$0xff]
        %v1136 = vld [vmem:[%s5 + $0x78] sm:$0xff]
        %1137 = vmatpush.msra.mxu0 %v1120
        %1138 = vmatpush.msra.mxu0 %v1119
        %1139 = vmatpush.msra.mxu0 %v1118
        %1140 = vmatpush.msra.mxu0 %v1117
        %1141 = vmatpush.msra.mxu0 %v1116
        %1142 = vmatpush.msra.mxu0 %v1115
        %1143 = vmatpush.msra.mxu0 %v1114
        %1144 = vmatpush.msra.mxu0 %v1113
        %1145 = vmatpush.msra.mxu0 %v1112
        %1146 = vmatpush.msra.mxu0 %v1111
        %1147 = vmatpush.msra.mxu0 %v1110
        %1148 = vmatpush.msra.mxu0 %v1109
        %1149 = vmatpush.msra.mxu0 %v1108
        %1150 = vmatpush.msra.mxu0 %v1107
        %1151 = vmatpush.msra.mxu0 %v1106
        %1152 = vmatpush.msra.mxu0 %v1105
        %1153 = vmatmul.f32.gmra.mxu0 %v1121
        %v1154 = vpop.f32.mrf.mxu0
        %v1155 = vadd.f32 0.0, %v1154
        %1156 = vmatmul.f32.gmra.mxu0 %v1122
        %v1157 = vpop.f32.mrf.mxu0
        %v1158 = vadd.f32 0.0, %v1157
        %1159 = vmatmul.f32.gmra.mxu0 %v1123
        %v1160 = vpop.f32.mrf.mxu0
        %v1161 = vadd.f32 0.0, %v1160
        %1162 = vmatmul.f32.gmra.mxu0 %v1124
        %v1163 = vpop.f32.mrf.mxu0
        %v1164 = vadd.f32 0.0, %v1163
        %1165 = vmatmul.f32.gmra.mxu0 %v1125
        %v1166 = vpop.f32.mrf.mxu0
        %v1167 = vadd.f32 0.0, %v1166
        %1168 = vmatmul.f32.gmra.mxu0 %v1126
        %v1169 = vpop.f32.mrf.mxu0
        %v1170 = vadd.f32 0.0, %v1169
        %1171 = vmatmul.f32.gmra.mxu0 %v1127
        %v1172 = vpop.f32.mrf.mxu0
        %v1173 = vadd.f32 0.0, %v1172
        %1174 = vmatmul.f32.gmra.mxu0 %v1128
        %v1175 = vpop.f32.mrf.mxu0
        %v1176 = vadd.f32 0.0, %v1175
        %1177 = vmatmul.f32.gmra.mxu0 %v1129
        %v1178 = vpop.f32.mrf.mxu0
        %v1179 = vadd.f32 0.0, %v1178
        %1180 = vmatmul.f32.gmra.mxu0 %v1130
        %v1181 = vpop.f32.mrf.mxu0
        %v1182 = vadd.f32 0.0, %v1181
        %1183 = vmatmul.f32.gmra.mxu0 %v1131
        %v1184 = vpop.f32.mrf.mxu0
        %v1185 = vadd.f32 0.0, %v1184
        %1186 = vmatmul.f32.gmra.mxu0 %v1132
        %v1187 = vpop.f32.mrf.mxu0
        %v1188 = vadd.f32 0.0, %v1187
        %1189 = vmatmul.f32.gmra.mxu0 %v1133
        %v1190 = vpop.f32.mrf.mxu0
        %v1191 = vadd.f32 0.0, %v1190
        %1192 = vmatmul.f32.gmra.mxu0 %v1134
        %v1193 = vpop.f32.mrf.mxu0
        %v1194 = vadd.f32 0.0, %v1193
        %1195 = vmatmul.f32.gmra.mxu0 %v1135
        %v1196 = vpop.f32.mrf.mxu0
        %v1197 = vadd.f32 0.0, %v1196
        %1198 = vmatmul.f32.gmra.mxu0 %v1136
        %v1199 = vpop.f32.mrf.mxu0
        %v1200 = vadd.f32 0.0, %v1199
        %1201 = vdwg.mxu0
        %v1202 = vsub.f32 %v612, %v1155
        %v1203 = vsub.f32 %v615, %v1158
        %v1204 = vsub.f32 %v618, %v1161
        %v1205 = vsub.f32 %v621, %v1164
        %v1206 = vsub.f32 %v624, %v1167
        %v1207 = vsub.f32 %v627, %v1170
        %v1208 = vsub.f32 %v630, %v1173
        %v1209 = vsub.f32 %v633, %v1176
        %v1210 = vsub.f32 %v636, %v1179
        %v1211 = vsub.f32 %v639, %v1182
        %v1212 = vsub.f32 %v642, %v1185
        %v1213 = vsub.f32 %v645, %v1188
        %v1214 = vsub.f32 %v648, %v1191
        %v1215 = vsub.f32 %v651, %v1194
        %v1216 = vsub.f32 %v654, %v1197
        %v1217 = vsub.f32 %v657, %v1200
        %v1218 = vmul.f32 %v1202, %v1202
        %v1219 = vmul.f32 %v1203, %v1203
        %v1220 = vmul.f32 %v1204, %v1204
        %v1221 = vmul.f32 %v1205, %v1205
        %v1222 = vmul.f32 %v1206, %v1206
        %v1223 = vmul.f32 %v1207, %v1207
        %v1224 = vmul.f32 %v1208, %v1208
        %v1225 = vmul.f32 %v1209, %v1209
        %v1226 = vmul.f32 %v1210, %v1210
        %v1227 = vmul.f32 %v1211, %v1211
        %v1228 = vmul.f32 %v1212, %v1212
        %v1229 = vmul.f32 %v1213, %v1213
        %v1230 = vmul.f32 %v1214, %v1214
        %v1231 = vmul.f32 %v1215, %v1215
        %v1232 = vmul.f32 %v1216, %v1216
        %v1233 = vmul.f32 %v1217, %v1217
        %v1234 = vadd.f32 %v1218, %v1219
        %v1235 = vadd.f32 %v1234, %v1220
        %v1236 = vadd.f32 %v1235, %v1221
        %v1237 = vadd.f32 %v1236, %v1222
        %v1238 = vadd.f32 %v1237, %v1223
        %v1239 = vadd.f32 %v1238, %v1224
        %v1240 = vadd.f32 %v1239, %v1225
        %v1241 = vadd.f32 %v1240, %v1226
        %v1242 = vadd.f32 %v1241, %v1227
        %v1243 = vadd.f32 %v1242, %v1228
        %v1244 = vadd.f32 %v1243, %v1229
        %v1245 = vadd.f32 %v1244, %v1230
        %v1246 = vadd.f32 %v1245, %v1231
        %v1247 = vadd.f32 %v1246, %v1232
        %v1248 = vadd.f32 %v1247, %v1233
        %v1249 = vrot.slane %v1248, 4
        %v1250 = vadd.f32 %v1248, %v1249
        %v1251 = vrot.slane %v1250, 2
        %v1252 = vadd.f32 %v1250, %v1251
        %v1253 = vrot.slane %v1252, 1
        %v1254 = vadd.f32 %v1252, %v1253
        %1255 = vst [vmem:[%s465] sm:$0x1] %v1254
        %v1256 = vld [vmem:[%s6] sm:$0xff]
        %v1257 = vld [vmem:[%s6 + $0x8] sm:$0xff]
        %v1258 = vld [vmem:[%s6 + $0x10] sm:$0xff]
        %v1259 = vld [vmem:[%s6 + $0x18] sm:$0xff]
        %v1260 = vld [vmem:[%s6 + $0x20] sm:$0xff]
        %v1261 = vld [vmem:[%s6 + $0x28] sm:$0xff]
        %v1262 = vld [vmem:[%s6 + $0x30] sm:$0xff]
        %v1263 = vld [vmem:[%s6 + $0x38] sm:$0xff]
        %v1264 = vld [vmem:[%s6 + $0x40] sm:$0xff]
        %v1265 = vld [vmem:[%s6 + $0x48] sm:$0xff]
        %v1266 = vld [vmem:[%s6 + $0x50] sm:$0xff]
        %v1267 = vld [vmem:[%s6 + $0x58] sm:$0xff]
        %v1268 = vld [vmem:[%s6 + $0x60] sm:$0xff]
        %v1269 = vld [vmem:[%s6 + $0x68] sm:$0xff]
        %v1270 = vld [vmem:[%s6 + $0x70] sm:$0xff]
        %v1271 = vld [vmem:[%s6 + $0x78] sm:$0xff]
        %v1272 = vld [vmem:[%s7] sm:$0xff]
        %v1273 = vld [vmem:[%s7 + $0x8] sm:$0xff]
        %v1274 = vld [vmem:[%s7 + $0x10] sm:$0xff]
        %v1275 = vld [vmem:[%s7 + $0x18] sm:$0xff]
        %v1276 = vld [vmem:[%s7 + $0x20] sm:$0xff]
        %v1277 = vld [vmem:[%s7 + $0x28] sm:$0xff]
        %v1278 = vld [vmem:[%s7 + $0x30] sm:$0xff]
        %v1279 = vld [vmem:[%s7 + $0x38] sm:$0xff]
        %v1280 = vld [vmem:[%s7 + $0x40] sm:$0xff]
        %v1281 = vld [vmem:[%s7 + $0x48] sm:$0xff]
        %v1282 = vld [vmem:[%s7 + $0x50] sm:$0xff]
        %v1283 = vld [vmem:[%s7 + $0x58] sm:$0xff]
        %v1284 = vld [vmem:[%s7 + $0x60] sm:$0xff]
        %v1285 = vld [vmem:[%s7 + $0x68] sm:$0xff]
        %v1286 = vld [vmem:[%s7 + $0x70] sm:$0xff]
        %v1287 = vld [vmem:[%s7 + $0x78] sm:$0xff]
        %1289 = vset.pattern.permute.xlu0 0
        %1290 = vperm.xlu0 %1289, %v1272
        %v1291 = vpop.permute.xlu0 %1290
        %1294 = vset.pattern.permute.xlu0 0
        %1295 = vperm.xlu0 %1294, %v1273
        %v1296 = vpop.permute.xlu0 %1295
        %1299 = vset.pattern.permute.xlu0 0
        %1300 = vperm.xlu0 %1299, %v1274
        %v1301 = vpop.permute.xlu0 %1300
        %1304 = vset.pattern.permute.xlu0 0
        %1305 = vperm.xlu0 %1304, %v1275
        %v1306 = vpop.permute.xlu0 %1305
        %1309 = vset.pattern.permute.xlu0 0
        %1310 = vperm.xlu0 %1309, %v1276
        %v1311 = vpop.permute.xlu0 %1310
        %1314 = vset.pattern.permute.xlu0 0
        %1315 = vperm.xlu0 %1314, %v1277
        %v1316 = vpop.permute.xlu0 %1315
        %1319 = vset.pattern.permute.xlu0 0
        %1320 = vperm.xlu0 %1319, %v1278
        %v1321 = vpop.permute.xlu0 %1320
        %1324 = vset.pattern.permute.xlu0 0
        %1325 = vperm.xlu0 %1324, %v1279
        %v1326 = vpop.permute.xlu0 %1325
        %1329 = vset.pattern.permute.xlu0 0
        %1330 = vperm.xlu0 %1329, %v1280
        %v1331 = vpop.permute.xlu0 %1330
        %1334 = vset.pattern.permute.xlu0 0
        %1335 = vperm.xlu0 %1334, %v1281
        %v1336 = vpop.permute.xlu0 %1335
        %1339 = vset.pattern.permute.xlu0 0
        %1340 = vperm.xlu0 %1339, %v1282
        %v1341 = vpop.permute.xlu0 %1340
        %1344 = vset.pattern.permute.xlu0 0
        %1345 = vperm.xlu0 %1344, %v1283
        %v1346 = vpop.permute.xlu0 %1345
        %1349 = vset.pattern.permute.xlu0 0
        %1350 = vperm.xlu0 %1349, %v1284
        %v1351 = vpop.permute.xlu0 %1350
        %1354 = vset.pattern.permute.xlu0 0
        %1355 = vperm.xlu0 %1354, %v1285
        %v1356 = vpop.permute.xlu0 %1355
        %1359 = vset.pattern.permute.xlu0 0
        %1360 = vperm.xlu0 %1359, %v1286
        %v1361 = vpop.permute.xlu0 %1360
        %1364 = vset.pattern.permute.xlu0 0
        %1365 = vperm.xlu0 %1364, %v1287
        %v1366 = vpop.permute.xlu0 %1365
        %1368 = vmatpush.msra.mxu0 %v1200
        %1369 = vmatpush.msra.mxu0 %v1197
        %1370 = vmatpush.msra.mxu0 %v1194
        %1371 = vmatpush.msra.mxu0 %v1191
        %1372 = vmatpush.msra.mxu0 %v1188
        %1373 = vmatpush.msra.mxu0 %v1185
        %1374 = vmatpush.msra.mxu0 %v1182
        %1375 = vmatpush.msra.mxu0 %v1179
        %1376 = vmatpush.msra.mxu0 %v1176
        %1377 = vmatpush.msra.mxu0 %v1173
        %1378 = vmatpush.msra.mxu0 %v1170
        %1379 = vmatpush.msra.mxu0 %v1167
        %1380 = vmatpush.msra.mxu0 %v1164
        %1381 = vmatpush.msra.mxu0 %v1161
        %1382 = vmatpush.msra.mxu0 %v1158
        %1383 = vmatpush.msra.mxu0 %v1155
        %1384 = vmatmul.f32.gmra.mxu0 %v1256
        %v1385 = vpop.f32.mrf.mxu0
        %v1386 = vadd.f32 %v1291, %v1385
        %1387 = vmatmul.f32.gmra.mxu0 %v1257
        %v1388 = vpop.f32.mrf.mxu0
        %v1389 = vadd.f32 %v1296, %v1388
        %1390 = vmatmul.f32.gmra.mxu0 %v1258
        %v1391 = vpop.f32.mrf.mxu0
        %v1392 = vadd.f32 %v1301, %v1391
        %1393 = vmatmul.f32.gmra.mxu0 %v1259
        %v1394 = vpop.f32.mrf.mxu0
        %v1395 = vadd.f32 %v1306, %v1394
        %1396 = vmatmul.f32.gmra.mxu0 %v1260
        %v1397 = vpop.f32.mrf.mxu0
        %v1398 = vadd.f32 %v1311, %v1397
        %1399 = vmatmul.f32.gmra.mxu0 %v1261
        %v1400 = vpop.f32.mrf.mxu0
        %v1401 = vadd.f32 %v1316, %v1400
        %1402 = vmatmul.f32.gmra.mxu0 %v1262
        %v1403 = vpop.f32.mrf.mxu0
        %v1404 = vadd.f32 %v1321, %v1403
        %1405 = vmatmul.f32.gmra.mxu0 %v1263
        %v1406 = vpop.f32.mrf.mxu0
        %v1407 = vadd.f32 %v1326, %v1406
        %1408 = vmatmul.f32.gmra.mxu0 %v1264
        %v1409 = vpop.f32.mrf.mxu0
        %v1410 = vadd.f32 %v1331, %v1409
        %1411 = vmatmul.f32.gmra.mxu0 %v1265
        %v1412 = vpop.f32.mrf.mxu0
        %v1413 = vadd.f32 %v1336, %v1412
        %1414 = vmatmul.f32.gmra.mxu0 %v1266
        %v1415 = vpop.f32.mrf.mxu0
        %v1416 = vadd.f32 %v1341, %v1415
        %1417 = vmatmul.f32.gmra.mxu0 %v1267
        %v1418 = vpop.f32.mrf.mxu0
        %v1419 = vadd.f32 %v1346, %v1418
        %1420 = vmatmul.f32.gmra.mxu0 %v1268
        %v1421 = vpop.f32.mrf.mxu0
        %v1422 = vadd.f32 %v1351, %v1421
        %1423 = vmatmul.f32.gmra.mxu0 %v1269
        %v1424 = vpop.f32.mrf.mxu0
        %v1425 = vadd.f32 %v1356, %v1424
        %1426 = vmatmul.f32.gmra.mxu0 %v1270
        %v1427 = vpop.f32.mrf.mxu0
        %v1428 = vadd.f32 %v1361, %v1427
        %1429 = vmatmul.f32.gmra.mxu0 %v1271
        %v1430 = vpop.f32.mrf.mxu0
        %v1431 = vadd.f32 %v1366, %v1430
        %1432 = vdwg.mxu0
        %1433 = vst [vmem:[%s451] sm:$0xff] %v1386
        %1434 = vst [vmem:[%s451 + $0x8] sm:$0xff] %v1389
        %1435 = vst [vmem:[%s451 + $0x10] sm:$0xff] %v1392
        %1436 = vst [vmem:[%s451 + $0x18] sm:$0xff] %v1395
        %1437 = vst [vmem:[%s451 + $0x20] sm:$0xff] %v1398
        %1438 = vst [vmem:[%s451 + $0x28] sm:$0xff] %v1401
        %1439 = vst [vmem:[%s451 + $0x30] sm:$0xff] %v1404
        %1440 = vst [vmem:[%s451 + $0x38] sm:$0xff] %v1407
        %1441 = vst [vmem:[%s451 + $0x40] sm:$0xff] %v1410
        %1442 = vst [vmem:[%s451 + $0x48] sm:$0xff] %v1413
        %1443 = vst [vmem:[%s451 + $0x50] sm:$0xff] %v1416
        %1444 = vst [vmem:[%s451 + $0x58] sm:$0xff] %v1419
        %1445 = vst [vmem:[%s451 + $0x60] sm:$0xff] %v1422
        %1446 = vst [vmem:[%s451 + $0x68] sm:$0xff] %v1425
        %1447 = vst [vmem:[%s451 + $0x70] sm:$0xff] %v1428
        %1448 = vst [vmem:[%s451 + $0x78] sm:$0xff] %v1431
        %p1449 = scmp.lt.s32.totalorder %s30, 1
        %s1450 = scalar_select %p1449, %s30, 1
        %p1451 = scmp.lt.s32.totalorder %s31, 0
        %s1452 = scalar_select %p1451, %s31, 0
        %s1453 = smul.addr %s1450, 16
        %s1454 = sadd.s32 %s1452, %s1453
        %s1455 = smul.addr %s1454, 8
        %s1456 = scalar_lea.vmem %s8, %s1455
        %p1457 = scmp.lt.s32.totalorder %s30, 1
        %s1458 = scalar_select %p1457, %s30, 1
        %p1459 = scmp.lt.s32.totalorder %s31, 0
        %s1460 = scalar_select %p1459, %s31, 0
        %s1461 = smul.addr %s1458, 16
        %s1462 = sadd.s32 %s1460, %s1461
        %s1463 = smul.addr %s1462, 8
        %s1464 = scalar_lea.vmem %s9, %s1463
        %s1465 = sand.u32 %s279, 1
        %s1466 = scalar_lea.sflag [#allocation3], %s1465
        %s1467 = sand.u32 %s279, 1
        %s1468 = scalar_lea.vmem [#allocation2], %s1467
        %p1469 = scmp.lt.s32.totalorder %s30, 1
        %s1470 = scalar_select %p1469, %s30, 1
        %p1471 = scmp.lt.s32.totalorder %s31, 0
        %s1472 = scalar_select %p1471, %s31, 0
        %s1473 = sadd.s32 %s1472, %s1470
        %s1474 = scalar_lea.vmem %s11, %s1473
        // Predicated region
        $region53: #{vector_quantize_forward.1} parent=51 // pred_check
          %p1475 = pneg %p233
        $region54: #{vector_quantize_forward.1} parent=51 // pred_check_branch
          %1477 = sbr.rel (%p1475) target = $region56
        $region55: #{vector_quantize_forward.1} parent=51 // pred_region
          _
        $region56: #{vector_quantize_forward.1} parent=51 // pred_fallthru
          _
        // Predicated region
        $region57: #{vector_quantize_forward.1} parent=51 // pred_check
          %p1478 = pneg %p261
        $region58: #{vector_quantize_forward.1} parent=51 // pred_check_branch
          %1480 = sbr.rel (%p1478) target = $region60
        $region59: #{vector_quantize_forward.1} parent=51 // pred_region
          _
        $region60: #{vector_quantize_forward.1} parent=51 // pred_fallthru
          _
        // Predicated region
        $region61: #{vector_quantize_forward.1} parent=51 // pred_check
          %p1481 = pneg %p289
        $region62: #{vector_quantize_forward.1} parent=51 // pred_check_branch
          %1483 = sbr.rel (%p1481) target = $region64
        $region63: #{vector_quantize_forward.1} parent=51 // pred_region
          %1485 = vsyncadd %s1466, 0
          %s1486 = sadd.s32 %s31, %s30
          %s1487 = scalar_lea.hbm %s10, %s1486
          %s1489 = sshll.u32 %s1468, 4
          %s1490 = int_to_ptr.vmem [resolvable:$true] %s1489
          %s1491 = sshll.u32 %s1487, 4
          %s1492 = int_to_ptr.hbm [resolvable:$true] %s1491
          %1494 = dma.vmem_to_hbm [thread:$0]  %s1490, 16, %s1492, %s1466
        $region64: #{vector_quantize_forward.1} parent=51 // pred_fallthru
          _
        // Predicated region
        $region65: #{vector_quantize_forward.1} parent=51 // pred_check
          %p1495 = pneg %p317
        $region66: #{vector_quantize_forward.1} parent=51 // pred_check_branch
          %1497 = sbr.rel (%p1495) target = $region68
        $region67: #{vector_quantize_forward.1} parent=51 // pred_region
          _
        $region68: #{vector_quantize_forward.1} parent=51 // pred_fallthru
          _
      $region52: #{vector_quantize_forward.1} parent=5 // pred_fallthru
        _
      %p1498 = scmp.le.s32.totalorder 2, %s21
      // Predicated region
      $region69: #{vector_quantize_forward.1} parent=5 // pred_check
        %p1499 = pneg %p1498
      $region70: #{vector_quantize_forward.1} parent=5 // pred_check_branch
        %1501 = sbr.rel (%p1499) target = $region72
      $region71: #{vector_quantize_forward.1} parent=5 // pred_region
        %s1502 = ssub.s32 %s21, 2
        // Predicated region
        $region73: #{vector_quantize_forward.1} parent=71 // pred_check
          %p1503 = pneg %p239
        $region74: #{vector_quantize_forward.1} parent=71 // pred_check_branch
          %1505 = sbr.rel (%p1503) target = $region76
        $region75: #{vector_quantize_forward.1} parent=71 // pred_region
          %p1506 = scmp.lt.s32.totalorder %s32, 1
          %s1507 = scalar_select %p1506, %s32, 1
          %p1508 = scmp.lt.s32.totalorder %s33, 0
          %s1509 = scalar_select %p1508, %s33, 0
          %s1510 = smul.addr %s1507, 16
          %s1511 = sadd.s32 %s1509, %s1510
          %s1512 = smul.addr %s1511, 8
          %s1513 = scalar_lea.vmem %s8, %s1512
        $region76: #{vector_quantize_forward.1} parent=71 // pred_fallthru
          _
        // Predicated region
        $region77: #{vector_quantize_forward.1} parent=71 // pred_check
          %p1514 = pneg %p267
        $region78: #{vector_quantize_forward.1} parent=71 // pred_check_branch
          %1516 = sbr.rel (%p1514) target = $region80
        $region79: #{vector_quantize_forward.1} parent=71 // pred_region
          %p1517 = scmp.lt.s32.totalorder %s32, 1
          %s1518 = scalar_select %p1517, %s32, 1
          %p1519 = scmp.lt.s32.totalorder %s33, 0
          %s1520 = scalar_select %p1519, %s33, 0
          %s1521 = smul.addr %s1518, 16
          %s1522 = sadd.s32 %s1520, %s1521
          %s1523 = smul.addr %s1522, 8
          %s1524 = scalar_lea.vmem %s9, %s1523
        $region80: #{vector_quantize_forward.1} parent=71 // pred_fallthru
          _
        // Predicated region
        $region81: #{vector_quantize_forward.1} parent=71 // pred_check
          %p1525 = pneg %p295
        $region82: #{vector_quantize_forward.1} parent=71 // pred_check_branch
          %1527 = sbr.rel (%p1525) target = $region84
        $region83: #{vector_quantize_forward.1} parent=71 // pred_region
          %s1528 = sand.u32 %s280, 1
          %s1529 = scalar_lea.sflag [#allocation3], %s1528
          %s1530 = sand.u32 %s280, 1
          %s1531 = scalar_lea.vmem [#allocation2], %s1530
          %1533 = dma.done %s1529, 16
        $region84: #{vector_quantize_forward.1} parent=71 // pred_fallthru
          _
        // Predicated region
        $region85: #{vector_quantize_forward.1} parent=71 // pred_check
          %p1534 = pneg %p323
        $region86: #{vector_quantize_forward.1} parent=71 // pred_check_branch
          %1536 = sbr.rel (%p1534) target = $region88
        $region87: #{vector_quantize_forward.1} parent=71 // pred_region
          %p1537 = scmp.lt.s32.totalorder %s32, 1
          %s1538 = scalar_select %p1537, %s32, 1
          %p1539 = scmp.lt.s32.totalorder %s33, 0
          %s1540 = scalar_select %p1539, %s33, 0
          %s1541 = sadd.s32 %s1540, %s1538
          %s1542 = scalar_lea.vmem %s11, %s1541
        $region88: #{vector_quantize_forward.1} parent=71 // pred_fallthru
          _
      $region72: #{vector_quantize_forward.1} parent=5 // pred_fallthru
        _
    $region6: #{vector_quantize_forward.1} parent=1 // loop_footer
      %s25 = sadd.s32 1, %s21
    $region7: #{vector_quantize_forward.1} parent=1 // loop_footer_branch
      %20 = sbr.rel target = $region3
    $region8: #{vector_quantize_forward.1} parent=1 // loop_exit
      _
    %1543 = vsyncpa [#allocation3], 1
    %s1544 = scalar_lea.sflag [#allocation3], 1
    %1545 = vsyncpa %s1544, 1

</llo_original>
